<compile_context>
chip_gen: v5e
topology: v5e:2x2
jax: 0.10.0
libtpu: 0.0.40
codegen_flags: <defaults>
</compile_context>

<pallas_src>
import jax
import jax.numpy as jnp
from jax import lax
from jax.experimental import pallas as pl
from jax.experimental.pallas import tpu as pltpu

TILE_DST = 128   # destination-node rows per grid step
H_PAD = 128      # hidden channels padded to a full lane width


def gat_tanh_kernel(x_ref, xdst_ref, adj_ref, wsrc_ref, wadst_ref, attsrc_ref,
                    bias_ref, out_ref):
    """Computes one TILE_DST-row strip of the GAT layer output."""
    # ---- source-side projection (bf16 operands, f32 accumulation on the MXU) ----
    h_src = jnp.dot(x_ref[...].astype(jnp.bfloat16), wsrc_ref[...],
                    preferred_element_type=jnp.float32)              # [Np, Hp]

    # a_src as a [1, Np] row: <att_src, h_src[j]> for every source node j.
    a_src = lax.dot_general(attsrc_ref[...], h_src,
                            (((1,), (1,)), ((), ())),
                            preferred_element_type=jnp.float32)      # [1, Np]

    # a_dst for this tile's destination rows via the pre-folded
    # w_adst = W_dst @ att_dst^T.  xdst_ref is the tiled view of x.
    a_dst = jnp.dot(xdst_ref[...], wadst_ref[...],
                    preferred_element_type=jnp.float32)              # [T, 1]

    # ---- edge logits, LeakyReLU(0.2), masked softmax over incoming edges (f32 VPU) ----
    e = a_dst + a_src                                                # [T, Np]
    e = jnp.where(e > 0, e, 0.2 * e)
    mask = adj_ref[...] != 0                                         # int8 strip [T, Np]
    e = jnp.where(mask, e, jnp.float32(-1e30))
    m = jnp.max(e, axis=-1, keepdims=True)
    p = jnp.where(mask, jnp.exp(e - m), 0.0)
    denom = jnp.maximum(jnp.sum(p, axis=-1, keepdims=True), jnp.float32(1e-20))
    alpha = p * pl.reciprocal(denom, approx=True)                    # EUP vrcp

    # ---- aggregate messages (MXU), add bias, tanh.  Kept f32 to preserve the
    #      attention-weight precision.
    out = jnp.dot(alpha, h_src, preferred_element_type=jnp.float32) + bias_ref[...]
    out_ref[...] = jnp.tanh(out)


def gnn_encoder_forward(x, adj, w_src, w_dst, att_src, att_dst, bias,
                        *, tile_dst=TILE_DST):
    """x: [N, F] f32, adj: [N, N] {0,1} (adj[dst, src]), weights as in GATConv."""
    N, F = x.shape
    H = w_src.shape[1]
    Hp = max(H_PAD, ((H + 127) // 128) * 128)
    Np = ((N + tile_dst - 1) // tile_dst) * tile_dst

    # --- tiny one-time parameter folding / padding in the wrapper ---
    w_src_p = jnp.zeros((F, Hp), jnp.bfloat16).at[:, :H].set(
        w_src.astype(jnp.bfloat16))                                  # [F, Hp] bf16
    w_adst = (w_dst @ att_dst.reshape(H, 1)).astype(jnp.float32)     # [F, 1]
    att_src_p = jnp.zeros((1, Hp), jnp.float32).at[:, :H].set(att_src)
    bias_p = jnp.zeros((1, Hp), jnp.float32).at[:, :H].set(bias)

    x_p = jnp.zeros((Np, F), jnp.float32).at[:N, :].set(x)
    adj_p = jnp.zeros((Np, Np), jnp.int8).at[:N, :N].set(adj.astype(jnp.int8))

    grid = (Np // tile_dst,)
    out = pl.pallas_call(
        gat_tanh_kernel,
        out_shape=jax.ShapeDtypeStruct((Np, Hp), jnp.float32),
        grid_spec=pltpu.PrefetchScalarGridSpec(
            num_scalar_prefetch=0,
            grid=grid,
            in_specs=[
                pl.BlockSpec((Np, F), lambda i: (0, 0)),            # x (resident, all src rows)
                pl.BlockSpec((tile_dst, F), lambda i: (i, 0)),      # x dst rows for this tile
                pl.BlockSpec((tile_dst, Np), lambda i: (i, 0)),     # int8 adjacency strip
                pl.BlockSpec((F, Hp), lambda i: (0, 0)),            # W_src (bf16, padded)
                pl.BlockSpec((F, 1), lambda i: (0, 0)),             # w_adst = W_dst @ att_dst^T
                pl.BlockSpec((1, Hp), lambda i: (0, 0)),            # att_src (padded)
                pl.BlockSpec((1, Hp), lambda i: (0, 0)),            # bias (padded)
            ],
            out_specs=pl.BlockSpec((tile_dst, Hp), lambda i: (i, 0)),
        ),
        compiler_params=pltpu.CompilerParams(
            dimension_semantics=("parallel",)),
    )(x_p, x_p, adj_p, w_src_p, w_adst, att_src_p, bias_p)

    return out[:N, :H]


def build_dense_adj(edge_index, num_nodes):
    """adj[dst, src] = 1 for each edge (src -> dst), plus self loops (int8)."""
    src, dst = edge_index[0], edge_index[1]
    adj = jnp.zeros((num_nodes, num_nodes), jnp.int8)
    adj = adj.at[dst, src].set(1)
    diag = jnp.arange(num_nodes)
    adj = adj.at[diag, diag].set(1)   # GATConv add_self_loops=True (default)
    return adj


def glorot(key, shape):
    fan_in, fan_out = shape[0], shape[1]
    limit = jnp.sqrt(6.0 / (fan_in + fan_out))
    return jax.random.uniform(key, shape, jnp.float32, -limit, limit)


if __name__ == "__main__":
    # Small shapes consistent with the module: N nodes with F input features,
    # hidden_channels = 32, num_layers = 1.  N chosen to exercise both padding
    # (200 -> 256) and multi-tile pipelining (grid = (2,)).
    N, F, H, E = 200, 8, 32, 800

    key = jax.random.PRNGKey(0)
    k_x, k_e1, k_e2, k_ws, k_wd, k_as, k_ad = jax.random.split(key, 7)

    x = jax.random.normal(k_x, (N, F), jnp.float32)
    edge_src = jax.random.randint(k_e1, (E,), 0, N)
    edge_dst = jax.random.randint(k_e2, (E,), 0, N)
    edge_index = jnp.stack([edge_src, edge_dst], axis=0)        # [2, E]
    adj = build_dense_adj(edge_index, N)

    # Deterministic GATConv parameters (heads=1, concat=True).
    w_src = glorot(k_ws, (F, H))
    w_dst = glorot(k_wd, (F, H))
    att_src = glorot(k_as, (1, H))
    att_dst = glorot(k_ad, (1, H))
    bias = jnp.zeros((1, H), jnp.float32)

    y = gnn_encoder_forward(x, adj, w_src, w_dst, att_src, att_dst, bias)
    y = jax.block_until_ready(y)

    assert y.shape == (N, H) and y.dtype == jnp.float32
    assert bool(jnp.all(jnp.isfinite(y)))
    print("KERNEL_OK")
</pallas_src>

<mosaic_0001>
module attributes {stable_mosaic.version = 11 : i64} {
  func.func @gat_tanh_kernel(%arg0: i32, %arg1: memref<256x8xf32, #tpu.memory_space<vmem>>, %arg2: memref<128x8xf32, #tpu.memory_space<vmem>>, %arg3: memref<128x256xi8, #tpu.memory_space<vmem>>, %arg4: memref<8x128xbf16, #tpu.memory_space<vmem>>, %arg5: memref<8x1xf32, #tpu.memory_space<vmem>>, %arg6: memref<1x128xf32, #tpu.memory_space<vmem>>, %arg7: memref<1x128xf32, #tpu.memory_space<vmem>>, %arg8: memref<128x128xf32, #tpu.memory_space<vmem>>) attributes {dimension_semantics = [#tpu.dimension_semantics<parallel>], iteration_bounds = array<i64: 2>, scalar_prefetch = 0 : i64, scratch_operands = 0 : i64, tpu.core_type = #tpu.core_type<tc>, window_params = [{pipeline_mode = #tpu.pipeline_mode<synchronous>, transform_indices = @transform_0, window_bounds = array<i64: 256, 8>}, {transform_indices = @transform_1, window_bounds = array<i64: 128, 8>}, {transform_indices = @transform_2, window_bounds = array<i64: 128, 256>}, {pipeline_mode = #tpu.pipeline_mode<synchronous>, transform_indices = @transform_3, window_bounds = array<i64: 8, 128>}, {pipeline_mode = #tpu.pipeline_mode<synchronous>, transform_indices = @transform_4, window_bounds = array<i64: 8, 1>}, {pipeline_mode = #tpu.pipeline_mode<synchronous>, transform_indices = @transform_5, window_bounds = array<i64: 1, 128>}, {pipeline_mode = #tpu.pipeline_mode<synchronous>, transform_indices = @transform_6, window_bounds = array<i64: 1, 128>}, {transform_indices = @transform_7, window_bounds = array<i64: 128, 128>}]} {
    %c0 = arith.constant 0 : index
    %c0_0 = arith.constant 0 : index
    %0 = vector.load %arg1[%c0, %c0_0] : memref<256x8xf32, #tpu.memory_space<vmem>>, vector<256x8xf32>
    %1 = arith.truncf %0 : vector<256x8xf32> to vector<256x8xbf16>
    %c0_1 = arith.constant 0 : index
    %c0_2 = arith.constant 0 : index
    %2 = vector.load %arg4[%c0_1, %c0_2] : memref<8x128xbf16, #tpu.memory_space<vmem>>, vector<8x128xbf16>
    %cst = arith.constant dense<0.000000e+00> : vector<256x128xf32>
    %3 = tpu.matmul %1, %2, %cst {dimension_numbers = #tpu.dot_dimension_numbers<[1], [0], [0], [1], [0, 0, 1, 1], [], []>} : vector<256x8xbf16>, vector<8x128xbf16>, vector<256x128xf32> -> vector<256x128xf32>
    %c0_3 = arith.constant 0 : index
    %c0_4 = arith.constant 0 : index
    %4 = vector.load %arg6[%c0_3, %c0_4] : memref<1x128xf32, #tpu.memory_space<vmem>>, vector<1x128xf32>
    %cst_5 = arith.constant dense<0.000000e+00> : vector<1x256xf32>
    %5 = tpu.matmul %4, %3, %cst_5 {dimension_numbers = #tpu.dot_dimension_numbers<[1], [1], [0], [0], [0, 0, 1, 0], [], []>} : vector<1x128xf32>, vector<256x128xf32>, vector<1x256xf32> -> vector<1x256xf32>
    %c0_6 = arith.constant 0 : index
    %c0_7 = arith.constant 0 : index
    %6 = vector.load %arg2[%c0_6, %c0_7] : memref<128x8xf32, #tpu.memory_space<vmem>>, vector<128x8xf32>
    %c0_8 = arith.constant 0 : index
    %c0_9 = arith.constant 0 : index
    %7 = vector.load %arg5[%c0_8, %c0_9] : memref<8x1xf32, #tpu.memory_space<vmem>>, vector<8x1xf32>
    %cst_10 = arith.constant dense<0.000000e+00> : vector<128x1xf32>
    %8 = tpu.matmul %6, %7, %cst_10 {dimension_numbers = #tpu.dot_dimension_numbers<[1], [0], [0], [1], [0, 0, 1, 1], [], []>} : vector<128x8xf32>, vector<8x1xf32>, vector<128x1xf32> -> vector<128x1xf32>
    %9 = vector.broadcast %8 : vector<128x1xf32> to vector<128x256xf32>
    %10 = vector.broadcast %5 : vector<1x256xf32> to vector<128x256xf32>
    %11 = arith.addf %9, %10 : vector<128x256xf32>
    %cst_11 = arith.constant 0.000000e+00 : f32
    %12 = vector.broadcast %cst_11 : f32 to vector<128x256xf32>
    %13 = arith.cmpf ogt, %11, %12 : vector<128x256xf32>
    %cst_12 = arith.constant 2.000000e-01 : f32
    %14 = vector.broadcast %cst_12 : f32 to vector<128x256xf32>
    %15 = arith.mulf %14, %11 : vector<128x256xf32>
    %16 = arith.select %13, %11, %15 : vector<128x256xi1>, vector<128x256xf32>
    %c0_13 = arith.constant 0 : index
    %c0_14 = arith.constant 0 : index
    %17 = vector.load %arg3[%c0_13, %c0_14] : memref<128x256xi8, #tpu.memory_space<vmem>>, vector<128x256xi8>
    %c0_i8 = arith.constant 0 : i8
    %18 = vector.broadcast %c0_i8 : i8 to vector<128x256xi8>
    %19 = arith.cmpi ne, %17, %18 : vector<128x256xi8>
    %cst_15 = arith.constant -1.000000e+30 : f32
    %20 = vector.broadcast %cst_15 : f32 to vector<128x256xf32>
    %21 = arith.select %19, %16, %20 : vector<128x256xi1>, vector<128x256xf32>
    %cst_16 = arith.constant dense<0xFF800000> : vector<128xf32>
    %22 = vector.multi_reduction <maximumf>, %21, %cst_16 [1] : vector<128x256xf32> to vector<128xf32>
    %23 = vector.shape_cast %22 : vector<128xf32> to vector<128x1xf32>
    %24 = vector.broadcast %23 : vector<128x1xf32> to vector<128x256xf32>
    %25 = arith.subf %21, %24 : vector<128x256xf32>
    %26 = math.exp %25 : vector<128x256xf32>
    %cst_17 = arith.constant 0.000000e+00 : f32
    %27 = vector.broadcast %cst_17 : f32 to vector<128x256xf32>
    %28 = arith.select %19, %26, %27 : vector<128x256xi1>, vector<128x256xf32>
    %cst_18 = arith.constant dense<0.000000e+00> : vector<128xf32>
    %29 = vector.multi_reduction <add>, %28, %cst_18 [1] : vector<128x256xf32> to vector<128xf32>
    %30 = vector.shape_cast %29 : vector<128xf32> to vector<128x1xf32>
    %cst_19 = arith.constant 9.99999968E-21 : f32
    %31 = vector.broadcast %cst_19 : f32 to vector<128x1xf32>
    %32 = arith.maximumf %30, %31 : vector<128x1xf32>
    %33 = tpu.reciprocal %32 {approx = true} : vector<128x1xf32> -> vector<128x1xf32>
    %34 = vector.broadcast %33 : vector<128x1xf32> to vector<128x256xf32>
    %35 = arith.mulf %28, %34 : vector<128x256xf32>
    %cst_20 = arith.constant dense<0.000000e+00> : vector<128x128xf32>
    %36 = tpu.matmul %35, %3, %cst_20 {dimension_numbers = #tpu.dot_dimension_numbers<[1], [0], [0], [1], [0, 0, 1, 1], [], []>} : vector<128x256xf32>, vector<256x128xf32>, vector<128x128xf32> -> vector<128x128xf32>
    %c0_21 = arith.constant 0 : index
    %c0_22 = arith.constant 0 : index
    %37 = vector.load %arg7[%c0_21, %c0_22] : memref<1x128xf32, #tpu.memory_space<vmem>>, vector<1x128xf32>
    %38 = vector.broadcast %37 : vector<1x128xf32> to vector<128x128xf32>
    %39 = arith.addf %36, %38 : vector<128x128xf32>
    %40 = math.tanh %39 : vector<128x128xf32>
    %c0_23 = arith.constant 0 : index
    %c0_24 = arith.constant 0 : index
    %41 = vector.load %arg8[%c0_23, %c0_24] : memref<128x128xf32, #tpu.memory_space<vmem>>, vector<128x128xf32>
    tpu.vector_store %arg8[%c0_23, %c0_24], %40 {strides = array<i32>} : memref<128x128xf32, #tpu.memory_space<vmem>>, vector<128x128xf32>,
    return
  }
  func.func @transform_0(%arg0: i32) -> (i32, i32) {
    %c0_i32 = arith.constant 0 : i32
    %c0_i32_0 = arith.constant 0 : i32
    %c0_i32_1 = arith.constant 0 : i32
    return %c0_i32, %c0_i32_0 : i32, i32
  }
  func.func @transform_1(%arg0: i32) -> (i32, i32) {
    %c0_i32 = arith.constant 0 : i32
    %c0_i32_0 = arith.constant 0 : i32
    return %arg0, %c0_i32 : i32, i32
  }
  func.func @transform_2(%arg0: i32) -> (i32, i32) {
    %c0_i32 = arith.constant 0 : i32
    %c0_i32_0 = arith.constant 0 : i32
    return %arg0, %c0_i32 : i32, i32
  }
  func.func @transform_3(%arg0: i32) -> (i32, i32) {
    %c0_i32 = arith.constant 0 : i32
    %c0_i32_0 = arith.constant 0 : i32
    %c0_i32_1 = arith.constant 0 : i32
    return %c0_i32, %c0_i32_0 : i32, i32
  }
  func.func @transform_4(%arg0: i32) -> (i32, i32) {
    %c0_i32 = arith.constant 0 : i32
    %c0_i32_0 = arith.constant 0 : i32
    %c0_i32_1 = arith.constant 0 : i32
    return %c0_i32, %c0_i32_0 : i32, i32
  }
  func.func @transform_5(%arg0: i32) -> (i32, i32) {
    %c0_i32 = arith.constant 0 : i32
    %c0_i32_0 = arith.constant 0 : i32
    %c0_i32_1 = arith.constant 0 : i32
    return %c0_i32, %c0_i32_0 : i32, i32
  }
  func.func @transform_6(%arg0: i32) -> (i32, i32) {
    %c0_i32 = arith.constant 0 : i32
    %c0_i32_0 = arith.constant 0 : i32
    %c0_i32_1 = arith.constant 0 : i32
    return %c0_i32, %c0_i32_0 : i32, i32
  }
  func.func @transform_7(%arg0: i32) -> (i32, i32) {
    %c0_i32 = arith.constant 0 : i32
    %c0_i32_0 = arith.constant 0 : i32
    return %arg0, %c0_i32 : i32, i32
  }
}

</mosaic_0001>

<llo_original>
// kernel: tpu_custom_call.1
$region0: #{tpu_custom_call.1}
  #allocation0 [shape = 'u32[]', space=smem, size = 0x4, offset = 0x4, fixed_abs, tag = 'smem constant byte address 0x4 - core index']
  #allocation1 [shape = 'u32[72,128]{1,0:T(1,128)}', space=vmem, size = 0x9000, scoped, tag = 'internal scratch']
  %s0 = inlined_call_operand.vmem [shape: f32[256,8], index: 0, kind: input, shape index: {}]
  %s1 = inlined_call_operand.vmem [shape: f32[256,8], index: 1, kind: input, shape index: {}]
  %s2 = inlined_call_operand.vmem [shape: s8[256,256], index: 2, kind: input, shape index: {}]
  %s3 = inlined_call_operand.vmem [shape: bf16[8,128], index: 3, kind: input, shape index: {}]
  %s4 = inlined_call_operand.vmem [shape: f32[8,1], index: 4, kind: input, shape index: {}]
  %s5 = inlined_call_operand.vmem [shape: f32[1,128], index: 5, kind: input, shape index: {}]
  %s6 = inlined_call_operand.vmem [shape: f32[1,128], index: 6, kind: input, shape index: {}]
  %s7 = inlined_call_operand.hbm [shape: f32[256,128], index: 7, kind: output, shape index: {}]
  %s8 = sld [smem:[#allocation0]]
  $region61: #{tpu_custom_call.1} parent=0
    _
  %s10 = ssub.s32 1, %s8
  %s11 = scalar_select 0, %s10, %s8
  $region1: #{tpu_custom_call.1} parent=0
    #allocation2 [shape = 'u8[131072]{0}', space=vmem, size = 0x20000, scoped, tag = 'output window, operand 0']
    #allocation3 [shape = 's32[2]{0}', space=sflag, size = 0x8, scoped, tag = 'scoped memory for tpu_custom_call.1']
    %12 = vsyncpa [#allocation3], 0
    %s13 = scalar_lea.sflag [#allocation3], 1
    %14 = vsyncpa %s13, 0
    loop: start=0, step=1, limit=4
    $region2: #{tpu_custom_call.1} parent=1 // loop_pre_header
      _
    $region3: #{tpu_custom_call.1} parent=1 // loop_header
      %s16 = sphi 0, %s20
      %p17 = scmp.ge.s32.totalorder %s16, 4
      %s24 = sphi 0, %s24
      %s26 = sphi 0, %s24
      %s27 = sphi 0, %s26
      %s41 = sphi 0, %s27
      %s47 = sphi 0, %s49
      %s50 = sphi 0, %s47
      %s51 = sphi 0, %s50
      %s67 = sphi 0, %s51
      %s73 = sphi 0, %s75
      %s76 = sphi 0, %s73
      %s77 = sphi 0, %s76
      %s93 = sphi 0, %s77
      %s97 = sphi 0, %s97
      %s99 = sphi 0, %s97
      %s100 = sphi 0, %s99
      %s114 = sphi 0, %s100
      %s118 = sphi 0, %s118
      %s120 = sphi 0, %s118
      %s121 = sphi 0, %s120
      %s135 = sphi 0, %s121
      %s139 = sphi 0, %s139
      %s141 = sphi 0, %s139
      %s142 = sphi 0, %s141
      %s156 = sphi 0, %s142
      %s160 = sphi 0, %s160
      %s162 = sphi 0, %s160
      %s163 = sphi 0, %s162
      %s177 = sphi 0, %s163
      %s183 = sphi 0, %s185
      %s186 = sphi 0, %s183
      %s187 = sphi 0, %s186
      %s203 = sphi 0, %s187
    $region4: #{tpu_custom_call.1} parent=1 // loop_header_branch
      %19 = sbr.rel (%p17) target = $region8
    $region5: #{tpu_custom_call.1} parent=1 // loop_body
      %s21 = ssub.s32 %s16, 1
      %s22 = ssub.s32 %s16, 2
      %s23 = sadd.s32 %s16, 1
      %s25 = sadd.s32 %s24, 1
      %p28 = scmp.eq.s32.totalorder %s16, 1
      %p29 = scmp.ne.s32.totalorder %s24, %s26
      %p30 = scmp.eq.s32.totalorder %s16, 0
      %p31 = por %p29, %p30
      %p32 = scmp.ne.s32.totalorder %s24, %s26
      %p33 = scmp.eq.s32.totalorder %s21, 1
      %p34 = por %p32, %p33
      %p35 = scmp.ne.s32.totalorder %s26, %s27
      %p36 = scmp.eq.s32.totalorder %s21, 0
      %p37 = por %p35, %p36
      %p38 = scmp.ne.s32.totalorder %s26, %s27
      %p39 = scmp.eq.s32.totalorder %s22, 1
      %p40 = por %p38, %p39
      %p42 = scmp.ne.s32.totalorder %s27, %s41
      %p43 = scmp.eq.s32.totalorder %s22, 0
      %p44 = por %p42, %p43
      %s45 = ssub.s32 %s16, %s23
      %p46 = scmp.eq.s32.totalorder %s45, 0
      %s48 = sadd.s32 %s47, 1
      %s49 = scalar_select %p46, %s47, %s48
      %p52 = pneg %p46
      %p53 = scmp.eq.s32.totalorder %s16, 1
      %p54 = por %p52, %p53
      %p55 = scmp.ne.s32.totalorder %s47, %s50
      %p56 = scmp.eq.s32.totalorder %s16, 0
      %p57 = por %p55, %p56
      %p58 = scmp.ne.s32.totalorder %s47, %s50
      %p59 = scmp.eq.s32.totalorder %s21, 1
      %p60 = por %p58, %p59
      %p61 = scmp.ne.s32.totalorder %s50, %s51
      %p62 = scmp.eq.s32.totalorder %s21, 0
      %p63 = por %p61, %p62
      %p64 = scmp.ne.s32.totalorder %s50, %s51
      %p65 = scmp.eq.s32.totalorder %s22, 1
      %p66 = por %p64, %p65
      %p68 = scmp.ne.s32.totalorder %s51, %s67
      %p69 = scmp.eq.s32.totalorder %s22, 0
      %p70 = por %p68, %p69
      %s71 = ssub.s32 %s16, %s23
      %p72 = scmp.eq.s32.totalorder %s71, 0
      %s74 = sadd.s32 %s73, 1
      %s75 = scalar_select %p72, %s73, %s74
      %p78 = pneg %p72
      %p79 = scmp.eq.s32.totalorder %s16, 1
      %p80 = por %p78, %p79
      %p81 = scmp.ne.s32.totalorder %s73, %s76
      %p82 = scmp.eq.s32.totalorder %s16, 0
      %p83 = por %p81, %p82
      %p84 = scmp.ne.s32.totalorder %s73, %s76
      %p85 = scmp.eq.s32.totalorder %s21, 1
      %p86 = por %p84, %p85
      %p87 = scmp.ne.s32.totalorder %s76, %s77
      %p88 = scmp.eq.s32.totalorder %s21, 0
      %p89 = por %p87, %p88
      %p90 = scmp.ne.s32.totalorder %s76, %s77
      %p91 = scmp.eq.s32.totalorder %s22, 1
      %p92 = por %p90, %p91
      %p94 = scmp.ne.s32.totalorder %s77, %s93
      %p95 = scmp.eq.s32.totalorder %s22, 0
      %p96 = por %p94, %p95
      %s98 = sadd.s32 %s97, 1
      %p101 = scmp.eq.s32.totalorder %s16, 1
      %p102 = scmp.ne.s32.totalorder %s97, %s99
      %p103 = scmp.eq.s32.totalorder %s16, 0
      %p104 = por %p102, %p103
      %p105 = scmp.ne.s32.totalorder %s97, %s99
      %p106 = scmp.eq.s32.totalorder %s21, 1
      %p107 = por %p105, %p106
      %p108 = scmp.ne.s32.totalorder %s99, %s100
      %p109 = scmp.eq.s32.totalorder %s21, 0
      %p110 = por %p108, %p109
      %p111 = scmp.ne.s32.totalorder %s99, %s100
      %p112 = scmp.eq.s32.totalorder %s22, 1
      %p113 = por %p111, %p112
      %p115 = scmp.ne.s32.totalorder %s100, %s114
      %p116 = scmp.eq.s32.totalorder %s22, 0
      %p117 = por %p115, %p116
      %s119 = sadd.s32 %s118, 1
      %p122 = scmp.eq.s32.totalorder %s16, 1
      %p123 = scmp.ne.s32.totalorder %s118, %s120
      %p124 = scmp.eq.s32.totalorder %s16, 0
      %p125 = por %p123, %p124
      %p126 = scmp.ne.s32.totalorder %s118, %s120
      %p127 = scmp.eq.s32.totalorder %s21, 1
      %p128 = por %p126, %p127
      %p129 = scmp.ne.s32.totalorder %s120, %s121
      %p130 = scmp.eq.s32.totalorder %s21, 0
      %p131 = por %p129, %p130
      %p132 = scmp.ne.s32.totalorder %s120, %s121
      %p133 = scmp.eq.s32.totalorder %s22, 1
      %p134 = por %p132, %p133
      %p136 = scmp.ne.s32.totalorder %s121, %s135
      %p137 = scmp.eq.s32.totalorder %s22, 0
      %p138 = por %p136, %p137
      %s140 = sadd.s32 %s139, 1
      %p143 = scmp.eq.s32.totalorder %s16, 1
      %p144 = scmp.ne.s32.totalorder %s139, %s141
      %p145 = scmp.eq.s32.totalorder %s16, 0
      %p146 = por %p144, %p145
      %p147 = scmp.ne.s32.totalorder %s139, %s141
      %p148 = scmp.eq.s32.totalorder %s21, 1
      %p149 = por %p147, %p148
      %p150 = scmp.ne.s32.totalorder %s141, %s142
      %p151 = scmp.eq.s32.totalorder %s21, 0
      %p152 = por %p150, %p151
      %p153 = scmp.ne.s32.totalorder %s141, %s142
      %p154 = scmp.eq.s32.totalorder %s22, 1
      %p155 = por %p153, %p154
      %p157 = scmp.ne.s32.totalorder %s142, %s156
      %p158 = scmp.eq.s32.totalorder %s22, 0
      %p159 = por %p157, %p158
      %s161 = sadd.s32 %s160, 1
      %p164 = scmp.eq.s32.totalorder %s16, 1
      %p165 = scmp.ne.s32.totalorder %s160, %s162
      %p166 = scmp.eq.s32.totalorder %s16, 0
      %p167 = por %p165, %p166
      %p168 = scmp.ne.s32.totalorder %s160, %s162
      %p169 = scmp.eq.s32.totalorder %s21, 1
      %p170 = por %p168, %p169
      %p171 = scmp.ne.s32.totalorder %s162, %s163
      %p172 = scmp.eq.s32.totalorder %s21, 0
      %p173 = por %p171, %p172
      %p174 = scmp.ne.s32.totalorder %s162, %s163
      %p175 = scmp.eq.s32.totalorder %s22, 1
      %p176 = por %p174, %p175
      %p178 = scmp.ne.s32.totalorder %s163, %s177
      %p179 = scmp.eq.s32.totalorder %s22, 0
      %p180 = por %p178, %p179
      %s181 = ssub.s32 %s16, %s23
      %p182 = scmp.eq.s32.totalorder %s181, 0
      %s184 = sadd.s32 %s183, 1
      %s185 = scalar_select %p182, %s183, %s184
      %p188 = pneg %p182
      %p189 = scmp.eq.s32.totalorder %s16, 1
      %p190 = por %p188, %p189
      %p191 = scmp.ne.s32.totalorder %s183, %s186
      %p192 = scmp.eq.s32.totalorder %s16, 0
      %p193 = por %p191, %p192
      %p194 = scmp.ne.s32.totalorder %s183, %s186
      %p195 = scmp.eq.s32.totalorder %s21, 1
      %p196 = por %p194, %p195
      %p197 = scmp.ne.s32.totalorder %s186, %s187
      %p198 = scmp.eq.s32.totalorder %s21, 0
      %p199 = por %p197, %p198
      %p200 = scmp.ne.s32.totalorder %s186, %s187
      %p201 = scmp.eq.s32.totalorder %s22, 1
      %p202 = por %p200, %p201
      %p204 = scmp.ne.s32.totalorder %s187, %s203
      %p205 = scmp.eq.s32.totalorder %s22, 0
      %p206 = por %p204, %p205
      %p207 = scmp.le.s32.totalorder 1, %s16
      %p208 = scmp.lt.s32.totalorder %s16, 3
      %p209 = pnand %p207, %p208
      %p210 = pneg %p209
      // Predicated region
      $region9: #{tpu_custom_call.1} parent=5 // pred_check
        _
      $region10: #{tpu_custom_call.1} parent=5 // pred_check_branch
        %212 = sbr.rel (%p209) target = $region12
      $region11: #{tpu_custom_call.1} parent=5 // pred_region
        %s213 = ssub.s32 %s16, 1
        // Predicated region
        $region13: #{tpu_custom_call.1} parent=11 // pred_check
          %p214 = pneg %p37
        $region14: #{tpu_custom_call.1} parent=11 // pred_check_branch
          %216 = sbr.rel (%p214) target = $region16
        $region15: #{tpu_custom_call.1} parent=11 // pred_region
          _
        $region16: #{tpu_custom_call.1} parent=11 // pred_fallthru
          _
        // Predicated region
        $region17: #{tpu_custom_call.1} parent=11 // pred_check
          %p217 = pneg %p110
        $region18: #{tpu_custom_call.1} parent=11 // pred_check_branch
          %219 = sbr.rel (%p217) target = $region20
        $region19: #{tpu_custom_call.1} parent=11 // pred_region
          _
        $region20: #{tpu_custom_call.1} parent=11 // pred_fallthru
          _
        // Predicated region
        $region21: #{tpu_custom_call.1} parent=11 // pred_check
          %p220 = pneg %p131
        $region22: #{tpu_custom_call.1} parent=11 // pred_check_branch
          %222 = sbr.rel (%p220) target = $region24
        $region23: #{tpu_custom_call.1} parent=11 // pred_region
          _
        $region24: #{tpu_custom_call.1} parent=11 // pred_fallthru
          _
        // Predicated region
        $region25: #{tpu_custom_call.1} parent=11 // pred_check
          %p223 = pneg %p152
        $region26: #{tpu_custom_call.1} parent=11 // pred_check_branch
          %225 = sbr.rel (%p223) target = $region28
        $region27: #{tpu_custom_call.1} parent=11 // pred_region
          _
        $region28: #{tpu_custom_call.1} parent=11 // pred_fallthru
          _
        // Predicated region
        $region29: #{tpu_custom_call.1} parent=11 // pred_check
          %p226 = pneg %p173
        $region30: #{tpu_custom_call.1} parent=11 // pred_check_branch
          %228 = sbr.rel (%p226) target = $region32
        $region31: #{tpu_custom_call.1} parent=11 // pred_region
          _
        $region32: #{tpu_custom_call.1} parent=11 // pred_fallthru
          _
      $region12: #{tpu_custom_call.1} parent=5 // pred_fallthru
        _
      %p229 = scmp.lt.s32.totalorder %s16, 2
      // Predicated region
      $region33: #{tpu_custom_call.1} parent=5 // pred_check
        %p230 = pneg %p229
      $region34: #{tpu_custom_call.1} parent=5 // pred_check_branch
        %232 = sbr.rel (%p230) target = $region36
      $region35: #{tpu_custom_call.1} parent=5 // pred_region
        // Predicated region
        $region37: #{tpu_custom_call.1} parent=35 // pred_check
          %p233 = pneg %p57
        $region38: #{tpu_custom_call.1} parent=35 // pred_check_branch
          %235 = sbr.rel (%p233) target = $region40
        $region39: #{tpu_custom_call.1} parent=35 // pred_region
          %s236 = smul.u32 16, %s16
          %p237 = scmp.lt.s32.totalorder %s236, 31
          %s238 = scalar_select %p237, %s236, 31
          %s239 = smul.addr %s238, 8
          %s240 = scalar_lea.vmem %s1, %s239
          %s241 = smul.u32 16, %s16
        $region40: #{tpu_custom_call.1} parent=35 // pred_fallthru
          _
        // Predicated region
        $region41: #{tpu_custom_call.1} parent=35 // pred_check
          %p242 = pneg %p83
        $region42: #{tpu_custom_call.1} parent=35 // pred_check_branch
          %244 = sbr.rel (%p242) target = $region44
        $region43: #{tpu_custom_call.1} parent=35 // pred_region
          %s245 = smul.u32 4, %s16
          %p246 = scmp.lt.s32.totalorder %s245, 7
          %s247 = scalar_select %p246, %s245, 7
          %s248 = smul.addr %s247, 2
          %s249 = smul.addr %s248, 8
          %s250 = scalar_lea.vmem %s2, %s249
          %s251 = smul.u32 4, %s16
        $region44: #{tpu_custom_call.1} parent=35 // pred_fallthru
          _
      $region36: #{tpu_custom_call.1} parent=5 // pred_fallthru
        _
      %p252 = scmp.le.s32.totalorder 1, %s16
      %p253 = scmp.lt.s32.totalorder %s16, 3
      %p254 = pnand %p252, %p253
      %p255 = pneg %p254
      // Predicated region
      $region45: #{tpu_custom_call.1} parent=5 // pred_check
        _
      $region46: #{tpu_custom_call.1} parent=5 // pred_check_branch
        %257 = sbr.rel (%p254) target = $region48
      $region47: #{tpu_custom_call.1} parent=5 // pred_region
        %s258 = ssub.s32 %s16, 1
        %p259 = pneg %p37
        %p260 = pneg %p34
        %s261 = smul.u32 16, %s21
        %p262 = scmp.lt.s32.totalorder %s261, 31
        %s263 = scalar_select %p262, %s261, 31
        %s264 = smul.addr %s263, 8
        %s265 = scalar_lea.vmem %s1, %s264
        %p266 = pneg %p63
        %p267 = pneg %p60
        %s268 = smul.u32 4, %s21
        %p269 = scmp.lt.s32.totalorder %s268, 7
        %s270 = scalar_select %p269, %s268, 7
        %s271 = smul.addr %s270, 2
        %s272 = smul.addr %s271, 8
        %s273 = scalar_lea.vmem %s2, %s272
        %p274 = pneg %p89
        %p275 = pneg %p86
        %p276 = pneg %p110
        %p277 = pneg %p107
        %p278 = pneg %p131
        %p279 = pneg %p128
        %p280 = pneg %p152
        %p281 = pneg %p149
        %p282 = pneg %p173
        %p283 = pneg %p170
        %p284 = pneg %p199
        %p285 = pneg %p196
        %s286 = sand.u32 %s186, 1
        %s287 = scalar_lea.sflag [#allocation3], %s286
        %s288 = sand.u32 %s186, 1
        %s289 = smul.addr %s288, 128
        %s290 = scalar_lea.vmem [#allocation2], %s289
        %s291 = smul.u32 16, %s21
        %p292 = scmp.lt.s32.totalorder %s291, 31
        %s293 = scalar_select %p292, %s291, 31
        %s294 = smul.addr %s293, 8
        %s295 = scalar_lea.vmem %s1, %s294
        %s296 = smul.u32 16, %s21
        %s297 = smul.u32 4, %s21
        %p298 = scmp.lt.s32.totalorder %s297, 7
        %s299 = scalar_select %p298, %s297, 7
        %s300 = smul.addr %s299, 2
        %s301 = smul.addr %s300, 8
        %s302 = scalar_lea.vmem %s2, %s301
        %s303 = smul.u32 4, %s21
        %s304 = smul.u32 16, %s21
        %v308 = vld [vmem:[%s0] sm:$0xff]
        %v309 = vld [vmem:[%s0 + $0x8] sm:$0xff]
        %v310 = vld [vmem:[%s0 + $0x10] sm:$0xff]
        %v311 = vld [vmem:[%s0 + $0x18] sm:$0xff]
        %v312 = vld [vmem:[%s0 + $0x20] sm:$0xff]
        %v313 = vld [vmem:[%s0 + $0x28] sm:$0xff]
        %v314 = vld [vmem:[%s0 + $0x30] sm:$0xff]
        %v315 = vld [vmem:[%s0 + $0x38] sm:$0xff]
        %v316 = vld [vmem:[%s0 + $0x40] sm:$0xff]
        %v317 = vld [vmem:[%s0 + $0x48] sm:$0xff]
        %v318 = vld [vmem:[%s0 + $0x50] sm:$0xff]
        %v319 = vld [vmem:[%s0 + $0x58] sm:$0xff]
        %v320 = vld [vmem:[%s0 + $0x60] sm:$0xff]
        %v321 = vld [vmem:[%s0 + $0x68] sm:$0xff]
        %v322 = vld [vmem:[%s0 + $0x70] sm:$0xff]
        %v323 = vld [vmem:[%s0 + $0x78] sm:$0xff]
        %v324 = vld [vmem:[%s0 + $0x80] sm:$0xff]
        %v325 = vld [vmem:[%s0 + $0x88] sm:$0xff]
        %v326 = vld [vmem:[%s0 + $0x90] sm:$0xff]
        %v327 = vld [vmem:[%s0 + $0x98] sm:$0xff]
        %v328 = vld [vmem:[%s0 + $0xa0] sm:$0xff]
        %v329 = vld [vmem:[%s0 + $0xa8] sm:$0xff]
        %v330 = vld [vmem:[%s0 + $0xb0] sm:$0xff]
        %v331 = vld [vmem:[%s0 + $0xb8] sm:$0xff]
        %v332 = vld [vmem:[%s0 + $0xc0] sm:$0xff]
        %v333 = vld [vmem:[%s0 + $0xc8] sm:$0xff]
        %v334 = vld [vmem:[%s0 + $0xd0] sm:$0xff]
        %v335 = vld [vmem:[%s0 + $0xd8] sm:$0xff]
        %v336 = vld [vmem:[%s0 + $0xe0] sm:$0xff]
        %v337 = vld [vmem:[%s0 + $0xe8] sm:$0xff]
        %v338 = vld [vmem:[%s0 + $0xf0] sm:$0xff]
        %v339 = vld [vmem:[%s0 + $0xf8] sm:$0xff]
        %v340 = vpack.c.bf16 %v309, %v308
        %v341 = vpack.c.bf16 %v311, %v310
        %v342 = vpack.c.bf16 %v313, %v312
        %v343 = vpack.c.bf16 %v315, %v314
        %v344 = vpack.c.bf16 %v317, %v316
        %v345 = vpack.c.bf16 %v319, %v318
        %v346 = vpack.c.bf16 %v321, %v320
        %v347 = vpack.c.bf16 %v323, %v322
        %v348 = vpack.c.bf16 %v325, %v324
        %v349 = vpack.c.bf16 %v327, %v326
        %v350 = vpack.c.bf16 %v329, %v328
        %v351 = vpack.c.bf16 %v331, %v330
        %v352 = vpack.c.bf16 %v333, %v332
        %v353 = vpack.c.bf16 %v335, %v334
        %v354 = vpack.c.bf16 %v337, %v336
        %v355 = vpack.c.bf16 %v339, %v338
        %v356 = vld [vmem:[%s3] sm:$0xf]
        %vm357 = vcmask 64512
        %v359 = vsel %vm357, %v340, 0
        %v362 = vsel %vm357, %v341, 0
        %v365 = vsel %vm357, %v342, 0
        %v368 = vsel %vm357, %v343, 0
        %v371 = vsel %vm357, %v344, 0
        %v374 = vsel %vm357, %v345, 0
        %v377 = vsel %vm357, %v346, 0
        %v380 = vsel %vm357, %v347, 0
        %v383 = vsel %vm357, %v348, 0
        %v386 = vsel %vm357, %v349, 0
        %v389 = vsel %vm357, %v350, 0
        %v392 = vsel %vm357, %v351, 0
        %v395 = vsel %vm357, %v352, 0
        %v398 = vsel %vm357, %v353, 0
        %v401 = vsel %vm357, %v354, 0
        %v404 = vsel %vm357, %v355, 0
        %vm406 = vcmask 1043456
        %v408 = vsel %vm406, %v356, 0
        %410 = vmatpush.bf16.msra.mxu0 0
        %411 = vmatpush.bf16.msra.mxu0 0
        %412 = vmatpush.bf16.msra.mxu0 0
        %413 = vmatpush.bf16.msra.mxu0 0
        %414 = vmatpush.bf16.msra.mxu0 0
        %415 = vmatpush.bf16.msra.mxu0 0
        %416 = vmatpush.bf16.msra.mxu0 0
        %417 = vmatpush.bf16.msra.mxu0 %v408
        %418 = vmatmul.bf16.gmra.mxu0 %v359
        %v419 = vpop.f32.mrf.mxu0
        %v420 = vadd.f32 0.0, %v419
        %v421 = vpop.f32.mrf.mxu0
        %v422 = vadd.f32 0.0, %v421
        %423 = vmatmul.bf16.gmra.mxu0 %v362
        %v424 = vpop.f32.mrf.mxu0
        %v425 = vadd.f32 0.0, %v424
        %v426 = vpop.f32.mrf.mxu0
        %v427 = vadd.f32 0.0, %v426
        %428 = vmatmul.bf16.gmra.mxu0 %v365
        %v429 = vpop.f32.mrf.mxu0
        %v430 = vadd.f32 0.0, %v429
        %v431 = vpop.f32.mrf.mxu0
        %v432 = vadd.f32 0.0, %v431
        %433 = vmatmul.bf16.gmra.mxu0 %v368
        %v434 = vpop.f32.mrf.mxu0
        %v435 = vadd.f32 0.0, %v434
        %v436 = vpop.f32.mrf.mxu0
        %v437 = vadd.f32 0.0, %v436
        %438 = vmatmul.bf16.gmra.mxu0 %v371
        %v439 = vpop.f32.mrf.mxu0
        %v440 = vadd.f32 0.0, %v439
        %v441 = vpop.f32.mrf.mxu0
        %v442 = vadd.f32 0.0, %v441
        %443 = vmatmul.bf16.gmra.mxu0 %v374
        %v444 = vpop.f32.mrf.mxu0
        %v445 = vadd.f32 0.0, %v444
        %v446 = vpop.f32.mrf.mxu0
        %v447 = vadd.f32 0.0, %v446
        %448 = vmatmul.bf16.gmra.mxu0 %v377
        %v449 = vpop.f32.mrf.mxu0
        %v450 = vadd.f32 0.0, %v449
        %v451 = vpop.f32.mrf.mxu0
        %v452 = vadd.f32 0.0, %v451
        %453 = vmatmul.bf16.gmra.mxu0 %v380
        %v454 = vpop.f32.mrf.mxu0
        %v455 = vadd.f32 0.0, %v454
        %v456 = vpop.f32.mrf.mxu0
        %v457 = vadd.f32 0.0, %v456
        %458 = vmatmul.bf16.gmra.mxu0 %v383
        %v459 = vpop.f32.mrf.mxu0
        %v460 = vadd.f32 0.0, %v459
        %v461 = vpop.f32.mrf.mxu0
        %v462 = vadd.f32 0.0, %v461
        %463 = vmatmul.bf16.gmra.mxu0 %v386
        %v464 = vpop.f32.mrf.mxu0
        %v465 = vadd.f32 0.0, %v464
        %v466 = vpop.f32.mrf.mxu0
        %v467 = vadd.f32 0.0, %v466
        %468 = vmatmul.bf16.gmra.mxu0 %v389
        %v469 = vpop.f32.mrf.mxu0
        %v470 = vadd.f32 0.0, %v469
        %v471 = vpop.f32.mrf.mxu0
        %v472 = vadd.f32 0.0, %v471
        %473 = vmatmul.bf16.gmra.mxu0 %v392
        %v474 = vpop.f32.mrf.mxu0
        %v475 = vadd.f32 0.0, %v474
        %v476 = vpop.f32.mrf.mxu0
        %v477 = vadd.f32 0.0, %v476
        %478 = vmatmul.bf16.gmra.mxu0 %v395
        %v479 = vpop.f32.mrf.mxu0
        %v480 = vadd.f32 0.0, %v479
        %v481 = vpop.f32.mrf.mxu0
        %v482 = vadd.f32 0.0, %v481
        %483 = vmatmul.bf16.gmra.mxu0 %v398
        %v484 = vpop.f32.mrf.mxu0
        %v485 = vadd.f32 0.0, %v484
        %v486 = vpop.f32.mrf.mxu0
        %v487 = vadd.f32 0.0, %v486
        %488 = vmatmul.bf16.gmra.mxu0 %v401
        %v489 = vpop.f32.mrf.mxu0
        %v490 = vadd.f32 0.0, %v489
        %v491 = vpop.f32.mrf.mxu0
        %v492 = vadd.f32 0.0, %v491
        %493 = vmatmul.bf16.gmra.mxu0 %v404
        %v494 = vpop.f32.mrf.mxu0
        %v495 = vadd.f32 0.0, %v494
        %v496 = vpop.f32.mrf.mxu0
        %v497 = vadd.f32 0.0, %v496
        %498 = vdwg.mxu0
        %v499 = vld [vmem:[%s5] sm:$0x1]
        %500 = vmatpush.xpose.msra.mxu0 %v457
        %501 = vmatpush.xpose.msra.mxu0 %v455
        %502 = vmatpush.xpose.msra.mxu0 %v452
        %503 = vmatpush.xpose.msra.mxu0 %v450
        %504 = vmatpush.xpose.msra.mxu0 %v447
        %505 = vmatpush.xpose.msra.mxu0 %v445
        %506 = vmatpush.xpose.msra.mxu0 %v442
        %507 = vmatpush.xpose.msra.mxu0 %v440
        %508 = vmatpush.xpose.msra.mxu0 %v437
        %509 = vmatpush.xpose.msra.mxu0 %v435
        %510 = vmatpush.xpose.msra.mxu0 %v432
        %511 = vmatpush.xpose.msra.mxu0 %v430
        %512 = vmatpush.xpose.msra.mxu0 %v427
        %513 = vmatpush.xpose.msra.mxu0 %v425
        %514 = vmatpush.xpose.msra.mxu0 %v422
        %515 = vmatpush.xpose.msra.mxu0 %v420
        %516 = vmatmul.f32.gmra.mxu0 %v499
        %v517 = vpop.f32.mrf.mxu0
        %v518 = vadd.f32 0.0, %v517
        %519 = vdwg.mxu0
        %520 = vmatpush.xpose.msra.mxu0 %v497
        %521 = vmatpush.xpose.msra.mxu0 %v495
        %522 = vmatpush.xpose.msra.mxu0 %v492
        %523 = vmatpush.xpose.msra.mxu0 %v490
        %524 = vmatpush.xpose.msra.mxu0 %v487
        %525 = vmatpush.xpose.msra.mxu0 %v485
        %526 = vmatpush.xpose.msra.mxu0 %v482
        %527 = vmatpush.xpose.msra.mxu0 %v480
        %528 = vmatpush.xpose.msra.mxu0 %v477
        %529 = vmatpush.xpose.msra.mxu0 %v475
        %530 = vmatpush.xpose.msra.mxu0 %v472
        %531 = vmatpush.xpose.msra.mxu0 %v470
        %532 = vmatpush.xpose.msra.mxu0 %v467
        %533 = vmatpush.xpose.msra.mxu0 %v465
        %534 = vmatpush.xpose.msra.mxu0 %v462
        %535 = vmatpush.xpose.msra.mxu0 %v460
        %536 = vmatmul.f32.gmra.mxu0 %v499
        %v537 = vpop.f32.mrf.mxu0
        %v538 = vadd.f32 0.0, %v537
        %539 = vdwg.mxu0
        %v540 = vld [vmem:[%s295] sm:$0xff]
        %v541 = vld [vmem:[%s295 + $0x8] sm:$0xff]
        %v542 = vld [vmem:[%s295 + $0x10] sm:$0xff]
        %v543 = vld [vmem:[%s295 + $0x18] sm:$0xff]
        %v544 = vld [vmem:[%s295 + $0x20] sm:$0xff]
        %v545 = vld [vmem:[%s295 + $0x28] sm:$0xff]
        %v546 = vld [vmem:[%s295 + $0x30] sm:$0xff]
        %v547 = vld [vmem:[%s295 + $0x38] sm:$0xff]
        %v548 = vld [vmem:[%s295 + $0x40] sm:$0xff]
        %v549 = vld [vmem:[%s295 + $0x48] sm:$0xff]
        %v550 = vld [vmem:[%s295 + $0x50] sm:$0xff]
        %v551 = vld [vmem:[%s295 + $0x58] sm:$0xff]
        %v552 = vld [vmem:[%s295 + $0x60] sm:$0xff]
        %v553 = vld [vmem:[%s295 + $0x68] sm:$0xff]
        %v554 = vld [vmem:[%s295 + $0x70] sm:$0xff]
        %v555 = vld [vmem:[%s295 + $0x78] sm:$0xff]
        %v556 = vld [vmem:[%s4] sm:$0xff]
        %v558 = vsel %vm357, %v540, 0
        %v561 = vsel %vm357, %v541, 0
        %v564 = vsel %vm357, %v542, 0
        %v567 = vsel %vm357, %v543, 0
        %v570 = vsel %vm357, %v544, 0
        %v573 = vsel %vm357, %v545, 0
        %v576 = vsel %vm357, %v546, 0
        %v579 = vsel %vm357, %v547, 0
        %v582 = vsel %vm357, %v548, 0
        %v585 = vsel %vm357, %v549, 0
        %v588 = vsel %vm357, %v550, 0
        %v591 = vsel %vm357, %v551, 0
        %v594 = vsel %vm357, %v552, 0
        %v597 = vsel %vm357, %v553, 0
        %v600 = vsel %vm357, %v554, 0
        %v603 = vsel %vm357, %v555, 0
        %605 = vmatpush.msra.mxu0 0.0
        %606 = vmatpush.msra.mxu0 0.0
        %607 = vmatpush.msra.mxu0 0.0
        %608 = vmatpush.msra.mxu0 0.0
        %609 = vmatpush.msra.mxu0 0.0
        %610 = vmatpush.msra.mxu0 0.0
        %611 = vmatpush.msra.mxu0 0.0
        %612 = vmatpush.msra.mxu0 0.0
        %613 = vmatpush.msra.mxu0 0.0
        %614 = vmatpush.msra.mxu0 0.0
        %615 = vmatpush.msra.mxu0 0.0
        %616 = vmatpush.msra.mxu0 0.0
        %617 = vmatpush.msra.mxu0 0.0
        %618 = vmatpush.msra.mxu0 0.0
        %619 = vmatpush.msra.mxu0 0.0
        %620 = vmatpush.msra.mxu0 %v556
        %621 = vmatmul.f32.gmra.mxu0 %v558
        %v622 = vpop.f32.mrf.mxu0
        %v623 = vadd.f32 0.0, %v622
        %624 = vmatmul.f32.gmra.mxu0 %v561
        %v625 = vpop.f32.mrf.mxu0
        %v626 = vadd.f32 0.0, %v625
        %627 = vmatmul.f32.gmra.mxu0 %v564
        %v628 = vpop.f32.mrf.mxu0
        %v629 = vadd.f32 0.0, %v628
        %630 = vmatmul.f32.gmra.mxu0 %v567
        %v631 = vpop.f32.mrf.mxu0
        %v632 = vadd.f32 0.0, %v631
        %633 = vmatmul.f32.gmra.mxu0 %v570
        %v634 = vpop.f32.mrf.mxu0
        %v635 = vadd.f32 0.0, %v634
        %636 = vmatmul.f32.gmra.mxu0 %v573
        %v637 = vpop.f32.mrf.mxu0
        %v638 = vadd.f32 0.0, %v637
        %639 = vmatmul.f32.gmra.mxu0 %v576
        %v640 = vpop.f32.mrf.mxu0
        %v641 = vadd.f32 0.0, %v640
        %642 = vmatmul.f32.gmra.mxu0 %v579
        %v643 = vpop.f32.mrf.mxu0
        %v644 = vadd.f32 0.0, %v643
        %645 = vmatmul.f32.gmra.mxu0 %v582
        %v646 = vpop.f32.mrf.mxu0
        %v647 = vadd.f32 0.0, %v646
        %648 = vmatmul.f32.gmra.mxu0 %v585
        %v649 = vpop.f32.mrf.mxu0
        %v650 = vadd.f32 0.0, %v649
        %651 = vmatmul.f32.gmra.mxu0 %v588
        %v652 = vpop.f32.mrf.mxu0
        %v653 = vadd.f32 0.0, %v652
        %654 = vmatmul.f32.gmra.mxu0 %v591
        %v655 = vpop.f32.mrf.mxu0
        %v656 = vadd.f32 0.0, %v655
        %657 = vmatmul.f32.gmra.mxu0 %v594
        %v658 = vpop.f32.mrf.mxu0
        %v659 = vadd.f32 0.0, %v658
        %660 = vmatmul.f32.gmra.mxu0 %v597
        %v661 = vpop.f32.mrf.mxu0
        %v662 = vadd.f32 0.0, %v661
        %663 = vmatmul.f32.gmra.mxu0 %v600
        %v664 = vpop.f32.mrf.mxu0
        %v665 = vadd.f32 0.0, %v664
        %666 = vmatmul.f32.gmra.mxu0 %v603
        %v667 = vpop.f32.mrf.mxu0
        %v668 = vadd.f32 0.0, %v667
        %669 = vdwg.mxu0
        %671 = vset.pattern.permute.xlu0 0
        %672 = vperm.xlu0 %671, %v623
        %v673 = vpop.permute.xlu0 %672
        %676 = vset.pattern.permute.xlu0 0
        %677 = vperm.xlu0 %676, %v626
        %v678 = vpop.permute.xlu0 %677
        %681 = vset.pattern.permute.xlu0 0
        %682 = vperm.xlu0 %681, %v629
        %v683 = vpop.permute.xlu0 %682
        %686 = vset.pattern.permute.xlu0 0
        %687 = vperm.xlu0 %686, %v632
        %v688 = vpop.permute.xlu0 %687
        %691 = vset.pattern.permute.xlu0 0
        %692 = vperm.xlu0 %691, %v635
        %v693 = vpop.permute.xlu0 %692
        %696 = vset.pattern.permute.xlu0 0
        %697 = vperm.xlu0 %696, %v638
        %v698 = vpop.permute.xlu0 %697
        %701 = vset.pattern.permute.xlu0 0
        %702 = vperm.xlu0 %701, %v641
        %v703 = vpop.permute.xlu0 %702
        %706 = vset.pattern.permute.xlu0 0
        %707 = vperm.xlu0 %706, %v644
        %v708 = vpop.permute.xlu0 %707
        %711 = vset.pattern.permute.xlu0 0
        %712 = vperm.xlu0 %711, %v647
        %v713 = vpop.permute.xlu0 %712
        %716 = vset.pattern.permute.xlu0 0
        %717 = vperm.xlu0 %716, %v650
        %v718 = vpop.permute.xlu0 %717
        %721 = vset.pattern.permute.xlu0 0
        %722 = vperm.xlu0 %721, %v653
        %v723 = vpop.permute.xlu0 %722
        %726 = vset.pattern.permute.xlu0 0
        %727 = vperm.xlu0 %726, %v656
        %v728 = vpop.permute.xlu0 %727
        %731 = vset.pattern.permute.xlu0 0
        %732 = vperm.xlu0 %731, %v659
        %v733 = vpop.permute.xlu0 %732
        %736 = vset.pattern.permute.xlu0 0
        %737 = vperm.xlu0 %736, %v662
        %v738 = vpop.permute.xlu0 %737
        %741 = vset.pattern.permute.xlu0 0
        %742 = vperm.xlu0 %741, %v665
        %v743 = vpop.permute.xlu0 %742
        %746 = vset.pattern.permute.xlu0 0
        %747 = vperm.xlu0 %746, %v668
        %v748 = vpop.permute.xlu0 %747
        %v750 = vperm.slane %v518, 0
        %v751 = vperm.slane %v538, 0
        %v752 = vadd.f32 %v673, %v750
        %v753 = vadd.f32 %v673, %v751
        %v754 = vadd.f32 %v678, %v750
        %v755 = vadd.f32 %v678, %v751
        %v756 = vadd.f32 %v683, %v750
        %v757 = vadd.f32 %v683, %v751
        %v758 = vadd.f32 %v688, %v750
        %v759 = vadd.f32 %v688, %v751
        %v760 = vadd.f32 %v693, %v750
        %v761 = vadd.f32 %v693, %v751
        %v762 = vadd.f32 %v698, %v750
        %v763 = vadd.f32 %v698, %v751
        %v764 = vadd.f32 %v703, %v750
        %v765 = vadd.f32 %v703, %v751
        %v766 = vadd.f32 %v708, %v750
        %v767 = vadd.f32 %v708, %v751
        %v768 = vadd.f32 %v713, %v750
        %v769 = vadd.f32 %v713, %v751
        %v770 = vadd.f32 %v718, %v750
        %v771 = vadd.f32 %v718, %v751
        %v772 = vadd.f32 %v723, %v750
        %v773 = vadd.f32 %v723, %v751
        %v774 = vadd.f32 %v728, %v750
        %v775 = vadd.f32 %v728, %v751
        %v776 = vadd.f32 %v733, %v750
        %v777 = vadd.f32 %v733, %v751
        %v778 = vadd.f32 %v738, %v750
        %v779 = vadd.f32 %v738, %v751
        %v780 = vadd.f32 %v743, %v750
        %v781 = vadd.f32 %v743, %v751
        %v782 = vadd.f32 %v748, %v750
        %v783 = vadd.f32 %v748, %v751
        %vm784 = vcmp.gt.f32.partialorder %v752, 0.0
        %vm785 = vcmp.gt.f32.partialorder %v753, 0.0
        %vm786 = vcmp.gt.f32.partialorder %v754, 0.0
        %vm787 = vcmp.gt.f32.partialorder %v755, 0.0
        %vm788 = vcmp.gt.f32.partialorder %v756, 0.0
        %vm789 = vcmp.gt.f32.partialorder %v757, 0.0
        %vm790 = vcmp.gt.f32.partialorder %v758, 0.0
        %vm791 = vcmp.gt.f32.partialorder %v759, 0.0
        %vm792 = vcmp.gt.f32.partialorder %v760, 0.0
        %vm793 = vcmp.gt.f32.partialorder %v761, 0.0
        %vm794 = vcmp.gt.f32.partialorder %v762, 0.0
        %vm795 = vcmp.gt.f32.partialorder %v763, 0.0
        %vm796 = vcmp.gt.f32.partialorder %v764, 0.0
        %vm797 = vcmp.gt.f32.partialorder %v765, 0.0
        %vm798 = vcmp.gt.f32.partialorder %v766, 0.0
        %vm799 = vcmp.gt.f32.partialorder %v767, 0.0
        %vm800 = vcmp.gt.f32.partialorder %v768, 0.0
        %vm801 = vcmp.gt.f32.partialorder %v769, 0.0
        %vm802 = vcmp.gt.f32.partialorder %v770, 0.0
        %vm803 = vcmp.gt.f32.partialorder %v771, 0.0
        %vm804 = vcmp.gt.f32.partialorder %v772, 0.0
        %vm805 = vcmp.gt.f32.partialorder %v773, 0.0
        %vm806 = vcmp.gt.f32.partialorder %v774, 0.0
        %vm807 = vcmp.gt.f32.partialorder %v775, 0.0
        %vm808 = vcmp.gt.f32.partialorder %v776, 0.0
        %vm809 = vcmp.gt.f32.partialorder %v777, 0.0
        %vm810 = vcmp.gt.f32.partialorder %v778, 0.0
        %vm811 = vcmp.gt.f32.partialorder %v779, 0.0
        %vm812 = vcmp.gt.f32.partialorder %v780, 0.0
        %vm813 = vcmp.gt.f32.partialorder %v781, 0.0
        %vm814 = vcmp.gt.f32.partialorder %v782, 0.0
        %vm815 = vcmp.gt.f32.partialorder %v783, 0.0
        %v816 = vmul.f32 %v752, 0.2
        %v817 = vmul.f32 %v753, 0.2
        %v818 = vmul.f32 %v754, 0.2
        %v819 = vmul.f32 %v755, 0.2
        %v820 = vmul.f32 %v756, 0.2
        %v821 = vmul.f32 %v757, 0.2
        %v822 = vmul.f32 %v758, 0.2
        %v823 = vmul.f32 %v759, 0.2
        %v824 = vmul.f32 %v760, 0.2
        %v825 = vmul.f32 %v761, 0.2
        %v826 = vmul.f32 %v762, 0.2
        %v827 = vmul.f32 %v763, 0.2
        %v828 = vmul.f32 %v764, 0.2
        %v829 = vmul.f32 %v765, 0.2
        %v830 = vmul.f32 %v766, 0.2
        %v831 = vmul.f32 %v767, 0.2
        %v832 = vmul.f32 %v768, 0.2
        %v833 = vmul.f32 %v769, 0.2
        %v834 = vmul.f32 %v770, 0.2
        %v835 = vmul.f32 %v771, 0.2
        %v836 = vmul.f32 %v772, 0.2
        %v837 = vmul.f32 %v773, 0.2
        %v838 = vmul.f32 %v774, 0.2
        %v839 = vmul.f32 %v775, 0.2
        %v840 = vmul.f32 %v776, 0.2
        %v841 = vmul.f32 %v777, 0.2
        %v842 = vmul.f32 %v778, 0.2
        %v843 = vmul.f32 %v779, 0.2
        %v844 = vmul.f32 %v780, 0.2
        %v845 = vmul.f32 %v781, 0.2
        %v846 = vmul.f32 %v782, 0.2
        %v847 = vmul.f32 %v783, 0.2
        %v848 = vsel %vm784, %v752, %v816
        %v849 = vsel %vm785, %v753, %v817
        %v850 = vsel %vm786, %v754, %v818
        %v851 = vsel %vm787, %v755, %v819
        %v852 = vsel %vm788, %v756, %v820
        %v853 = vsel %vm789, %v757, %v821
        %v854 = vsel %vm790, %v758, %v822
        %v855 = vsel %vm791, %v759, %v823
        %v856 = vsel %vm792, %v760, %v824
        %v857 = vsel %vm793, %v761, %v825
        %v858 = vsel %vm794, %v762, %v826
        %v859 = vsel %vm795, %v763, %v827
        %v860 = vsel %vm796, %v764, %v828
        %v861 = vsel %vm797, %v765, %v829
        %v862 = vsel %vm798, %v766, %v830
        %v863 = vsel %vm799, %v767, %v831
        %v864 = vsel %vm800, %v768, %v832
        %v865 = vsel %vm801, %v769, %v833
        %v866 = vsel %vm802, %v770, %v834
        %v867 = vsel %vm803, %v771, %v835
        %v868 = vsel %vm804, %v772, %v836
        %v869 = vsel %vm805, %v773, %v837
        %v870 = vsel %vm806, %v774, %v838
        %v871 = vsel %vm807, %v775, %v839
        %v872 = vsel %vm808, %v776, %v840
        %v873 = vsel %vm809, %v777, %v841
        %v874 = vsel %vm810, %v778, %v842
        %v875 = vsel %vm811, %v779, %v843
        %v876 = vsel %vm812, %v780, %v844
        %v877 = vsel %vm813, %v781, %v845
        %v878 = vsel %vm814, %v782, %v846
        %v879 = vsel %vm815, %v783, %v847
        %v880 = vld [vmem:[%s302] sm:$0xff]
        %v881 = vld [vmem:[%s302 + $0x8] sm:$0xff]
        %v882 = vld [vmem:[%s302 + $0x10] sm:$0xff]
        %v883 = vld [vmem:[%s302 + $0x18] sm:$0xff]
        %v884 = vld [vmem:[%s302 + $0x20] sm:$0xff]
        %v885 = vld [vmem:[%s302 + $0x28] sm:$0xff]
        %v886 = vld [vmem:[%s302 + $0x30] sm:$0xff]
        %v887 = vld [vmem:[%s302 + $0x38] sm:$0xff]
        %vm888 = vnez %v880
        %vm889 = vnez %v881
        %vm890 = vnez %v882
        %vm891 = vnez %v883
        %vm892 = vnez %v884
        %vm893 = vnez %v885
        %vm894 = vnez %v886
        %vm895 = vnez %v887
        %v896 = vsel %vm888, 16843009, 0
        %v897 = vsel %vm889, 16843009, 0
        %v898 = vsel %vm890, 16843009, 0
        %v899 = vsel %vm891, 16843009, 0
        %v900 = vsel %vm892, 16843009, 0
        %v901 = vsel %vm893, 16843009, 0
        %v902 = vsel %vm894, 16843009, 0
        %v903 = vsel %vm895, 16843009, 0
        %v904 = vunpack.c.0.s8 %v896
        %v905 = vunpack.c.0.s8 %v897
        %v906 = vunpack.c.1.s8 %v896
        %v907 = vunpack.c.1.s8 %v897
        %v908 = vunpack.c.2.s8 %v896
        %v909 = vunpack.c.2.s8 %v897
        %v910 = vunpack.c.3.s8 %v896
        %v911 = vunpack.c.3.s8 %v897
        %v912 = vunpack.c.0.s8 %v898
        %v913 = vunpack.c.0.s8 %v899
        %v914 = vunpack.c.1.s8 %v898
        %v915 = vunpack.c.1.s8 %v899
        %v916 = vunpack.c.2.s8 %v898
        %v917 = vunpack.c.2.s8 %v899
        %v918 = vunpack.c.3.s8 %v898
        %v919 = vunpack.c.3.s8 %v899
        %v920 = vunpack.c.0.s8 %v900
        %v921 = vunpack.c.0.s8 %v901
        %v922 = vunpack.c.1.s8 %v900
        %v923 = vunpack.c.1.s8 %v901
        %v924 = vunpack.c.2.s8 %v900
        %v925 = vunpack.c.2.s8 %v901
        %v926 = vunpack.c.3.s8 %v900
        %v927 = vunpack.c.3.s8 %v901
        %v928 = vunpack.c.0.s8 %v902
        %v929 = vunpack.c.0.s8 %v903
        %v930 = vunpack.c.1.s8 %v902
        %v931 = vunpack.c.1.s8 %v903
        %v932 = vunpack.c.2.s8 %v902
        %v933 = vunpack.c.2.s8 %v903
        %v934 = vunpack.c.3.s8 %v902
        %v935 = vunpack.c.3.s8 %v903
        %v936 = vpack.c.b16 %v905, %v904
        %v937 = vpack.c.b8 %v936, %v936
        %v938 = vpack.c.b16 %v907, %v906
        %v939 = vpack.c.b8 %v938, %v938
        %v940 = vpack.c.b16 %v909, %v908
        %v941 = vpack.c.b8 %v940, %v940
        %v942 = vpack.c.b16 %v911, %v910
        %v943 = vpack.c.b8 %v942, %v942
        %v944 = vpack.c.b16 %v913, %v912
        %v945 = vpack.c.b8 %v944, %v944
        %v946 = vpack.c.b16 %v915, %v914
        %v947 = vpack.c.b8 %v946, %v946
        %v948 = vpack.c.b16 %v917, %v916
        %v949 = vpack.c.b8 %v948, %v948
        %v950 = vpack.c.b16 %v919, %v918
        %v951 = vpack.c.b8 %v950, %v950
        %v952 = vpack.c.b16 %v921, %v920
        %v953 = vpack.c.b8 %v952, %v952
        %v954 = vpack.c.b16 %v923, %v922
        %v955 = vpack.c.b8 %v954, %v954
        %v956 = vpack.c.b16 %v925, %v924
        %v957 = vpack.c.b8 %v956, %v956
        %v958 = vpack.c.b16 %v927, %v926
        %v959 = vpack.c.b8 %v958, %v958
        %v960 = vpack.c.b16 %v929, %v928
        %v961 = vpack.c.b8 %v960, %v960
        %v962 = vpack.c.b16 %v931, %v930
        %v963 = vpack.c.b8 %v962, %v962
        %v964 = vpack.c.b16 %v933, %v932
        %v965 = vpack.c.b8 %v964, %v964
        %v966 = vpack.c.b16 %v935, %v934
        %v967 = vpack.c.b8 %v966, %v966
        %vm968 = vnez %v937
        %vm969 = vnez %v939
        %vm970 = vnez %v941
        %vm971 = vnez %v943
        %vm972 = vnez %v945
        %vm973 = vnez %v947
        %vm974 = vnez %v949
        %vm975 = vnez %v951
        %vm976 = vnez %v953
        %vm977 = vnez %v955
        %vm978 = vnez %v957
        %vm979 = vnez %v959
        %vm980 = vnez %v961
        %vm981 = vnez %v963
        %vm982 = vnez %v965
        %vm983 = vnez %v967
        %v984 = vsel %vm968, 16843009, 0
        %v985 = vsel %vm969, 16843009, 0
        %v986 = vsel %vm970, 16843009, 0
        %v987 = vsel %vm971, 16843009, 0
        %v988 = vsel %vm972, 16843009, 0
        %v989 = vsel %vm973, 16843009, 0
        %v990 = vsel %vm974, 16843009, 0
        %v991 = vsel %vm975, 16843009, 0
        %v992 = vsel %vm976, 16843009, 0
        %v993 = vsel %vm977, 16843009, 0
        %v994 = vsel %vm978, 16843009, 0
        %v995 = vsel %vm979, 16843009, 0
        %v996 = vsel %vm980, 16843009, 0
        %v997 = vsel %vm981, 16843009, 0
        %v998 = vsel %vm982, 16843009, 0
        %v999 = vsel %vm983, 16843009, 0
        %v1000 = vunpack.c.0.s8 %v984
        %v1001 = vunpack.c.1.s8 %v984
        %v1002 = vunpack.c.0.s8 %v985
        %v1003 = vunpack.c.1.s8 %v985
        %v1004 = vunpack.c.0.s8 %v986
        %v1005 = vunpack.c.1.s8 %v986
        %v1006 = vunpack.c.0.s8 %v987
        %v1007 = vunpack.c.1.s8 %v987
        %v1008 = vunpack.c.0.s8 %v988
        %v1009 = vunpack.c.1.s8 %v988
        %v1010 = vunpack.c.0.s8 %v989
        %v1011 = vunpack.c.1.s8 %v989
        %v1012 = vunpack.c.0.s8 %v990
        %v1013 = vunpack.c.1.s8 %v990
        %v1014 = vunpack.c.0.s8 %v991
        %v1015 = vunpack.c.1.s8 %v991
        %v1016 = vunpack.c.0.s8 %v992
        %v1017 = vunpack.c.1.s8 %v992
        %v1018 = vunpack.c.0.s8 %v993
        %v1019 = vunpack.c.1.s8 %v993
        %v1020 = vunpack.c.0.s8 %v994
        %v1021 = vunpack.c.1.s8 %v994
        %v1022 = vunpack.c.0.s8 %v995
        %v1023 = vunpack.c.1.s8 %v995
        %v1024 = vunpack.c.0.s8 %v996
        %v1025 = vunpack.c.1.s8 %v996
        %v1026 = vunpack.c.0.s8 %v997
        %v1027 = vunpack.c.1.s8 %v997
        %v1028 = vunpack.c.0.s8 %v998
        %v1029 = vunpack.c.1.s8 %v998
        %v1030 = vunpack.c.0.s8 %v999
        %v1031 = vunpack.c.1.s8 %v999
        %vm1032 = vcmp.ne.s32.totalorder %v1000, 0
        %vm1033 = vcmp.ne.s32.totalorder %v1001, 0
        %vm1034 = vcmp.ne.s32.totalorder %v1002, 0
        %vm1035 = vcmp.ne.s32.totalorder %v1003, 0
        %vm1036 = vcmp.ne.s32.totalorder %v1004, 0
        %vm1037 = vcmp.ne.s32.totalorder %v1005, 0
        %vm1038 = vcmp.ne.s32.totalorder %v1006, 0
        %vm1039 = vcmp.ne.s32.totalorder %v1007, 0
        %vm1040 = vcmp.ne.s32.totalorder %v1008, 0
        %vm1041 = vcmp.ne.s32.totalorder %v1009, 0
        %vm1042 = vcmp.ne.s32.totalorder %v1010, 0
        %vm1043 = vcmp.ne.s32.totalorder %v1011, 0
        %vm1044 = vcmp.ne.s32.totalorder %v1012, 0
        %vm1045 = vcmp.ne.s32.totalorder %v1013, 0
        %vm1046 = vcmp.ne.s32.totalorder %v1014, 0
        %vm1047 = vcmp.ne.s32.totalorder %v1015, 0
        %vm1048 = vcmp.ne.s32.totalorder %v1016, 0
        %vm1049 = vcmp.ne.s32.totalorder %v1017, 0
        %vm1050 = vcmp.ne.s32.totalorder %v1018, 0
        %vm1051 = vcmp.ne.s32.totalorder %v1019, 0
        %vm1052 = vcmp.ne.s32.totalorder %v1020, 0
        %vm1053 = vcmp.ne.s32.totalorder %v1021, 0
        %vm1054 = vcmp.ne.s32.totalorder %v1022, 0
        %vm1055 = vcmp.ne.s32.totalorder %v1023, 0
        %vm1056 = vcmp.ne.s32.totalorder %v1024, 0
        %vm1057 = vcmp.ne.s32.totalorder %v1025, 0
        %vm1058 = vcmp.ne.s32.totalorder %v1026, 0
        %vm1059 = vcmp.ne.s32.totalorder %v1027, 0
        %vm1060 = vcmp.ne.s32.totalorder %v1028, 0
        %vm1061 = vcmp.ne.s32.totalorder %v1029, 0
        %vm1062 = vcmp.ne.s32.totalorder %v1030, 0
        %vm1063 = vcmp.ne.s32.totalorder %v1031, 0
        %v1064 = vsel %vm1032, %v848, -1e+30
        %v1065 = vsel %vm1033, %v849, -1e+30
        %v1066 = vsel %vm1034, %v850, -1e+30
        %v1067 = vsel %vm1035, %v851, -1e+30
        %v1068 = vsel %vm1036, %v852, -1e+30
        %v1069 = vsel %vm1037, %v853, -1e+30
        %v1070 = vsel %vm1038, %v854, -1e+30
        %v1071 = vsel %vm1039, %v855, -1e+30
        %v1072 = vsel %vm1040, %v856, -1e+30
        %v1073 = vsel %vm1041, %v857, -1e+30
        %v1074 = vsel %vm1042, %v858, -1e+30
        %v1075 = vsel %vm1043, %v859, -1e+30
        %v1076 = vsel %vm1044, %v860, -1e+30
        %v1077 = vsel %vm1045, %v861, -1e+30
        %v1078 = vsel %vm1046, %v862, -1e+30
        %v1079 = vsel %vm1047, %v863, -1e+30
        %v1080 = vsel %vm1048, %v864, -1e+30
        %v1081 = vsel %vm1049, %v865, -1e+30
        %v1082 = vsel %vm1050, %v866, -1e+30
        %v1083 = vsel %vm1051, %v867, -1e+30
        %v1084 = vsel %vm1052, %v868, -1e+30
        %v1085 = vsel %vm1053, %v869, -1e+30
        %v1086 = vsel %vm1054, %v870, -1e+30
        %v1087 = vsel %vm1055, %v871, -1e+30
        %v1088 = vsel %vm1056, %v872, -1e+30
        %v1089 = vsel %vm1057, %v873, -1e+30
        %v1090 = vsel %vm1058, %v874, -1e+30
        %v1091 = vsel %vm1059, %v875, -1e+30
        %v1092 = vsel %vm1060, %v876, -1e+30
        %v1093 = vsel %vm1061, %v877, -1e+30
        %v1094 = vsel %vm1062, %v878, -1e+30
        %v1095 = vsel %vm1063, %v879, -1e+30
        %v1096 = vmax.f32 %v1064, %v1065
        %1097 = vmax.xlane.f32.xlu0 %v1096
        %v1098 = vpop.xlane.xlu0 %1097
        %v1099 = vmax.f32 %v1066, %v1067
        %1100 = vmax.xlane.f32.xlu0 %v1099
        %v1101 = vpop.xlane.xlu0 %1100
        %v1102 = vmax.f32 %v1068, %v1069
        %1103 = vmax.xlane.f32.xlu0 %v1102
        %v1104 = vpop.xlane.xlu0 %1103
        %v1105 = vmax.f32 %v1070, %v1071
        %1106 = vmax.xlane.f32.xlu0 %v1105
        %v1107 = vpop.xlane.xlu0 %1106
        %v1108 = vmax.f32 %v1072, %v1073
        %1109 = vmax.xlane.f32.xlu0 %v1108
        %v1110 = vpop.xlane.xlu0 %1109
        %v1111 = vmax.f32 %v1074, %v1075
        %1112 = vmax.xlane.f32.xlu0 %v1111
        %v1113 = vpop.xlane.xlu0 %1112
        %v1114 = vmax.f32 %v1076, %v1077
        %1115 = vmax.xlane.f32.xlu0 %v1114
        %v1116 = vpop.xlane.xlu0 %1115
        %v1117 = vmax.f32 %v1078, %v1079
        %1118 = vmax.xlane.f32.xlu0 %v1117
        %v1119 = vpop.xlane.xlu0 %1118
        %v1120 = vmax.f32 %v1080, %v1081
        %1121 = vmax.xlane.f32.xlu0 %v1120
        %v1122 = vpop.xlane.xlu0 %1121
        %v1123 = vmax.f32 %v1082, %v1083
        %1124 = vmax.xlane.f32.xlu0 %v1123
        %v1125 = vpop.xlane.xlu0 %1124
        %v1126 = vmax.f32 %v1084, %v1085
        %1127 = vmax.xlane.f32.xlu0 %v1126
        %v1128 = vpop.xlane.xlu0 %1127
        %v1129 = vmax.f32 %v1086, %v1087
        %1130 = vmax.xlane.f32.xlu0 %v1129
        %v1131 = vpop.xlane.xlu0 %1130
        %v1132 = vmax.f32 %v1088, %v1089
        %1133 = vmax.xlane.f32.xlu0 %v1132
        %v1134 = vpop.xlane.xlu0 %1133
        %v1135 = vmax.f32 %v1090, %v1091
        %1136 = vmax.xlane.f32.xlu0 %v1135
        %v1137 = vpop.xlane.xlu0 %1136
        %v1138 = vmax.f32 %v1092, %v1093
        %1139 = vmax.xlane.f32.xlu0 %v1138
        %v1140 = vpop.xlane.xlu0 %1139
        %v1141 = vmax.f32 %v1094, %v1095
        %1142 = vmax.xlane.f32.xlu0 %v1141
        %v1143 = vpop.xlane.xlu0 %1142
        %v1144 = vsub.f32 %v1064, %v1098
        %v1145 = vsub.f32 %v1065, %v1098
        %v1146 = vsub.f32 %v1066, %v1101
        %v1147 = vsub.f32 %v1067, %v1101
        %v1148 = vsub.f32 %v1068, %v1104
        %v1149 = vsub.f32 %v1069, %v1104
        %v1150 = vsub.f32 %v1070, %v1107
        %v1151 = vsub.f32 %v1071, %v1107
        %v1152 = vsub.f32 %v1072, %v1110
        %v1153 = vsub.f32 %v1073, %v1110
        %v1154 = vsub.f32 %v1074, %v1113
        %v1155 = vsub.f32 %v1075, %v1113
        %v1156 = vsub.f32 %v1076, %v1116
        %v1157 = vsub.f32 %v1077, %v1116
        %v1158 = vsub.f32 %v1078, %v1119
        %v1159 = vsub.f32 %v1079, %v1119
        %v1160 = vsub.f32 %v1080, %v1122
        %v1161 = vsub.f32 %v1081, %v1122
        %v1162 = vsub.f32 %v1082, %v1125
        %v1163 = vsub.f32 %v1083, %v1125
        %v1164 = vsub.f32 %v1084, %v1128
        %v1165 = vsub.f32 %v1085, %v1128
        %v1166 = vsub.f32 %v1086, %v1131
        %v1167 = vsub.f32 %v1087, %v1131
        %v1168 = vsub.f32 %v1088, %v1134
        %v1169 = vsub.f32 %v1089, %v1134
        %v1170 = vsub.f32 %v1090, %v1137
        %v1171 = vsub.f32 %v1091, %v1137
        %v1172 = vsub.f32 %v1092, %v1140
        %v1173 = vsub.f32 %v1093, %v1140
        %v1174 = vsub.f32 %v1094, %v1143
        %v1175 = vsub.f32 %v1095, %v1143
        %v1176 = vmul.f32 %v1144, 1.442695
        %v1177 = vpow.pop %v1176
        %v1178 = vmul.f32 %v1145, 1.442695
        %v1179 = vpow.pop %v1178
        %v1180 = vmul.f32 %v1146, 1.442695
        %v1181 = vpow.pop %v1180
        %v1182 = vmul.f32 %v1147, 1.442695
        %v1183 = vpow.pop %v1182
        %v1184 = vmul.f32 %v1148, 1.442695
        %v1185 = vpow.pop %v1184
        %v1186 = vmul.f32 %v1149, 1.442695
        %v1187 = vpow.pop %v1186
        %v1188 = vmul.f32 %v1150, 1.442695
        %v1189 = vpow.pop %v1188
        %v1190 = vmul.f32 %v1151, 1.442695
        %v1191 = vpow.pop %v1190
        %v1192 = vmul.f32 %v1152, 1.442695
        %v1193 = vpow.pop %v1192
        %v1194 = vmul.f32 %v1153, 1.442695
        %v1195 = vpow.pop %v1194
        %v1196 = vmul.f32 %v1154, 1.442695
        %v1197 = vpow.pop %v1196
        %v1198 = vmul.f32 %v1155, 1.442695
        %v1199 = vpow.pop %v1198
        %v1200 = vmul.f32 %v1156, 1.442695
        %v1201 = vpow.pop %v1200
        %v1202 = vmul.f32 %v1157, 1.442695
        %v1203 = vpow.pop %v1202
        %v1204 = vmul.f32 %v1158, 1.442695
        %v1205 = vpow.pop %v1204
        %v1206 = vmul.f32 %v1159, 1.442695
        %v1207 = vpow.pop %v1206
        %v1208 = vmul.f32 %v1160, 1.442695
        %v1209 = vpow.pop %v1208
        %v1210 = vmul.f32 %v1161, 1.442695
        %v1211 = vpow.pop %v1210
        %v1212 = vmul.f32 %v1162, 1.442695
        %v1213 = vpow.pop %v1212
        %v1214 = vmul.f32 %v1163, 1.442695
        %v1215 = vpow.pop %v1214
        %v1216 = vmul.f32 %v1164, 1.442695
        %v1217 = vpow.pop %v1216
        %v1218 = vmul.f32 %v1165, 1.442695
        %v1219 = vpow.pop %v1218
        %v1220 = vmul.f32 %v1166, 1.442695
        %v1221 = vpow.pop %v1220
        %v1222 = vmul.f32 %v1167, 1.442695
        %v1223 = vpow.pop %v1222
        %v1224 = vmul.f32 %v1168, 1.442695
        %v1225 = vpow.pop %v1224
        %v1226 = vmul.f32 %v1169, 1.442695
        %v1227 = vpow.pop %v1226
        %v1228 = vmul.f32 %v1170, 1.442695
        %v1229 = vpow.pop %v1228
        %v1230 = vmul.f32 %v1171, 1.442695
        %v1231 = vpow.pop %v1230
        %v1232 = vmul.f32 %v1172, 1.442695
        %v1233 = vpow.pop %v1232
        %v1234 = vmul.f32 %v1173, 1.442695
        %v1235 = vpow.pop %v1234
        %v1236 = vmul.f32 %v1174, 1.442695
        %v1237 = vpow.pop %v1236
        %v1238 = vmul.f32 %v1175, 1.442695
        %v1239 = vpow.pop %v1238
        %v1240 = vsel %vm1032, %v1177, 0.0
        %v1241 = vsel %vm1033, %v1179, 0.0
        %v1242 = vsel %vm1034, %v1181, 0.0
        %v1243 = vsel %vm1035, %v1183, 0.0
        %v1244 = vsel %vm1036, %v1185, 0.0
        %v1245 = vsel %vm1037, %v1187, 0.0
        %v1246 = vsel %vm1038, %v1189, 0.0
        %v1247 = vsel %vm1039, %v1191, 0.0
        %v1248 = vsel %vm1040, %v1193, 0.0
        %v1249 = vsel %vm1041, %v1195, 0.0
        %v1250 = vsel %vm1042, %v1197, 0.0
        %v1251 = vsel %vm1043, %v1199, 0.0
        %v1252 = vsel %vm1044, %v1201, 0.0
        %v1253 = vsel %vm1045, %v1203, 0.0
        %v1254 = vsel %vm1046, %v1205, 0.0
        %v1255 = vsel %vm1047, %v1207, 0.0
        %v1256 = vsel %vm1048, %v1209, 0.0
        %v1257 = vsel %vm1049, %v1211, 0.0
        %v1258 = vsel %vm1050, %v1213, 0.0
        %v1259 = vsel %vm1051, %v1215, 0.0
        %v1260 = vsel %vm1052, %v1217, 0.0
        %v1261 = vsel %vm1053, %v1219, 0.0
        %v1262 = vsel %vm1054, %v1221, 0.0
        %v1263 = vsel %vm1055, %v1223, 0.0
        %v1264 = vsel %vm1056, %v1225, 0.0
        %v1265 = vsel %vm1057, %v1227, 0.0
        %v1266 = vsel %vm1058, %v1229, 0.0
        %v1267 = vsel %vm1059, %v1231, 0.0
        %v1268 = vsel %vm1060, %v1233, 0.0
        %v1269 = vsel %vm1061, %v1235, 0.0
        %v1270 = vsel %vm1062, %v1237, 0.0
        %v1271 = vsel %vm1063, %v1239, 0.0
        %v1272 = vadd.f32 %v1240, %v1241
        %1273 = vadd.xlane.f32.xlu0 %v1272
        %v1274 = vpop.xlane.xlu0 %1273
        %v1275 = vadd.f32 %v1242, %v1243
        %1276 = vadd.xlane.f32.xlu0 %v1275
        %v1277 = vpop.xlane.xlu0 %1276
        %v1278 = vadd.f32 %v1244, %v1245
        %1279 = vadd.xlane.f32.xlu0 %v1278
        %v1280 = vpop.xlane.xlu0 %1279
        %v1281 = vadd.f32 %v1246, %v1247
        %1282 = vadd.xlane.f32.xlu0 %v1281
        %v1283 = vpop.xlane.xlu0 %1282
        %v1284 = vadd.f32 %v1248, %v1249
        %1285 = vadd.xlane.f32.xlu0 %v1284
        %v1286 = vpop.xlane.xlu0 %1285
        %v1287 = vadd.f32 %v1250, %v1251
        %1288 = vadd.xlane.f32.xlu0 %v1287
        %v1289 = vpop.xlane.xlu0 %1288
        %v1290 = vadd.f32 %v1252, %v1253
        %1291 = vadd.xlane.f32.xlu0 %v1290
        %v1292 = vpop.xlane.xlu0 %1291
        %v1293 = vadd.f32 %v1254, %v1255
        %1294 = vadd.xlane.f32.xlu0 %v1293
        %v1295 = vpop.xlane.xlu0 %1294
        %v1296 = vadd.f32 %v1256, %v1257
        %1297 = vadd.xlane.f32.xlu0 %v1296
        %v1298 = vpop.xlane.xlu0 %1297
        %v1299 = vadd.f32 %v1258, %v1259
        %1300 = vadd.xlane.f32.xlu0 %v1299
        %v1301 = vpop.xlane.xlu0 %1300
        %v1302 = vadd.f32 %v1260, %v1261
        %1303 = vadd.xlane.f32.xlu0 %v1302
        %v1304 = vpop.xlane.xlu0 %1303
        %v1305 = vadd.f32 %v1262, %v1263
        %1306 = vadd.xlane.f32.xlu0 %v1305
        %v1307 = vpop.xlane.xlu0 %1306
        %v1308 = vadd.f32 %v1264, %v1265
        %1309 = vadd.xlane.f32.xlu0 %v1308
        %v1310 = vpop.xlane.xlu0 %1309
        %v1311 = vadd.f32 %v1266, %v1267
        %1312 = vadd.xlane.f32.xlu0 %v1311
        %v1313 = vpop.xlane.xlu0 %1312
        %v1314 = vadd.f32 %v1268, %v1269
        %1315 = vadd.xlane.f32.xlu0 %v1314
        %v1316 = vpop.xlane.xlu0 %1315
        %v1317 = vadd.f32 %v1270, %v1271
        %1318 = vadd.xlane.f32.xlu0 %v1317
        %v1319 = vpop.xlane.xlu0 %1318
        %v1320 = vmax.f32 %v1274, 1e-20
        %v1321 = vmax.f32 %v1277, 1e-20
        %v1322 = vmax.f32 %v1280, 1e-20
        %v1323 = vmax.f32 %v1283, 1e-20
        %v1324 = vmax.f32 %v1286, 1e-20
        %v1325 = vmax.f32 %v1289, 1e-20
        %v1326 = vmax.f32 %v1292, 1e-20
        %v1327 = vmax.f32 %v1295, 1e-20
        %v1328 = vmax.f32 %v1298, 1e-20
        %v1329 = vmax.f32 %v1301, 1e-20
        %v1330 = vmax.f32 %v1304, 1e-20
        %v1331 = vmax.f32 %v1307, 1e-20
        %v1332 = vmax.f32 %v1310, 1e-20
        %v1333 = vmax.f32 %v1313, 1e-20
        %v1334 = vmax.f32 %v1316, 1e-20
        %v1335 = vmax.f32 %v1319, 1e-20
        %v1336 = vrcp.pop %v1320
        %v1337 = vrcp.pop %v1321
        %v1338 = vrcp.pop %v1322
        %v1339 = vrcp.pop %v1323
        %v1340 = vrcp.pop %v1324
        %v1341 = vrcp.pop %v1325
        %v1342 = vrcp.pop %v1326
        %v1343 = vrcp.pop %v1327
        %v1344 = vrcp.pop %v1328
        %v1345 = vrcp.pop %v1329
        %v1346 = vrcp.pop %v1330
        %v1347 = vrcp.pop %v1331
        %v1348 = vrcp.pop %v1332
        %v1349 = vrcp.pop %v1333
        %v1350 = vrcp.pop %v1334
        %v1351 = vrcp.pop %v1335
        %v1352 = vmul.f32 %v1240, %v1336
        %v1353 = vmul.f32 %v1241, %v1336
        %v1354 = vmul.f32 %v1242, %v1337
        %v1355 = vmul.f32 %v1243, %v1337
        %v1356 = vmul.f32 %v1244, %v1338
        %v1357 = vmul.f32 %v1245, %v1338
        %v1358 = vmul.f32 %v1246, %v1339
        %v1359 = vmul.f32 %v1247, %v1339
        %v1360 = vmul.f32 %v1248, %v1340
        %v1361 = vmul.f32 %v1249, %v1340
        %v1362 = vmul.f32 %v1250, %v1341
        %v1363 = vmul.f32 %v1251, %v1341
        %v1364 = vmul.f32 %v1252, %v1342
        %v1365 = vmul.f32 %v1253, %v1342
        %v1366 = vmul.f32 %v1254, %v1343
        %v1367 = vmul.f32 %v1255, %v1343
        %v1368 = vmul.f32 %v1256, %v1344
        %v1369 = vmul.f32 %v1257, %v1344
        %v1370 = vmul.f32 %v1258, %v1345
        %v1371 = vmul.f32 %v1259, %v1345
        %v1372 = vmul.f32 %v1260, %v1346
        %v1373 = vmul.f32 %v1261, %v1346
        %v1374 = vmul.f32 %v1262, %v1347
        %v1375 = vmul.f32 %v1263, %v1347
        %v1376 = vmul.f32 %v1264, %v1348
        %v1377 = vmul.f32 %v1265, %v1348
        %v1378 = vmul.f32 %v1266, %v1349
        %v1379 = vmul.f32 %v1267, %v1349
        %v1380 = vmul.f32 %v1268, %v1350
        %v1381 = vmul.f32 %v1269, %v1350
        %v1382 = vmul.f32 %v1270, %v1351
        %v1383 = vmul.f32 %v1271, %v1351
        %v1384 = vld [vmem:[%s6] sm:$0x1]
        %v1386 = vperm.slane %v1384, 0
        %1388 = vmatpush.msra.mxu0 %v457
        %1389 = vmatpush.msra.mxu0 %v455
        %1390 = vmatpush.msra.mxu0 %v452
        %1391 = vmatpush.msra.mxu0 %v450
        %1392 = vmatpush.msra.mxu0 %v447
        %1393 = vmatpush.msra.mxu0 %v445
        %1394 = vmatpush.msra.mxu0 %v442
        %1395 = vmatpush.msra.mxu0 %v440
        %1396 = vmatpush.msra.mxu0 %v437
        %1397 = vmatpush.msra.mxu0 %v435
        %1398 = vmatpush.msra.mxu0 %v432
        %1399 = vmatpush.msra.mxu0 %v430
        %1400 = vmatpush.msra.mxu0 %v427
        %1401 = vmatpush.msra.mxu0 %v425
        %1402 = vmatpush.msra.mxu0 %v422
        %1403 = vmatpush.msra.mxu0 %v420
        %1404 = vmatmul.f32.gmra.mxu0 %v1352
        %v1405 = vpop.f32.mrf.mxu0
        %v1406 = vadd.f32 %v1386, %v1405
        %1407 = vmatmul.f32.gmra.mxu0 %v1354
        %v1408 = vpop.f32.mrf.mxu0
        %v1409 = vadd.f32 %v1386, %v1408
        %1410 = vmatmul.f32.gmra.mxu0 %v1356
        %v1411 = vpop.f32.mrf.mxu0
        %v1412 = vadd.f32 %v1386, %v1411
        %1413 = vmatmul.f32.gmra.mxu0 %v1358
        %v1414 = vpop.f32.mrf.mxu0
        %v1415 = vadd.f32 %v1386, %v1414
        %1416 = vmatmul.f32.gmra.mxu0 %v1360
        %v1417 = vpop.f32.mrf.mxu0
        %v1418 = vadd.f32 %v1386, %v1417
        %1419 = vmatmul.f32.gmra.mxu0 %v1362
        %v1420 = vpop.f32.mrf.mxu0
        %v1421 = vadd.f32 %v1386, %v1420
        %1422 = vmatmul.f32.gmra.mxu0 %v1364
        %v1423 = vpop.f32.mrf.mxu0
        %v1424 = vadd.f32 %v1386, %v1423
        %1425 = vmatmul.f32.gmra.mxu0 %v1366
        %v1426 = vpop.f32.mrf.mxu0
        %v1427 = vadd.f32 %v1386, %v1426
        %1428 = vmatmul.f32.gmra.mxu0 %v1368
        %v1429 = vpop.f32.mrf.mxu0
        %v1430 = vadd.f32 %v1386, %v1429
        %1431 = vmatmul.f32.gmra.mxu0 %v1370
        %v1432 = vpop.f32.mrf.mxu0
        %v1433 = vadd.f32 %v1386, %v1432
        %1434 = vmatmul.f32.gmra.mxu0 %v1372
        %v1435 = vpop.f32.mrf.mxu0
        %v1436 = vadd.f32 %v1386, %v1435
        %1437 = vmatmul.f32.gmra.mxu0 %v1374
        %v1438 = vpop.f32.mrf.mxu0
        %v1439 = vadd.f32 %v1386, %v1438
        %1440 = vmatmul.f32.gmra.mxu0 %v1376
        %v1441 = vpop.f32.mrf.mxu0
        %v1442 = vadd.f32 %v1386, %v1441
        %1443 = vmatmul.f32.gmra.mxu0 %v1378
        %v1444 = vpop.f32.mrf.mxu0
        %v1445 = vadd.f32 %v1386, %v1444
        %1446 = vmatmul.f32.gmra.mxu0 %v1380
        %v1447 = vpop.f32.mrf.mxu0
        %v1448 = vadd.f32 %v1386, %v1447
        %1449 = vmatmul.f32.gmra.mxu0 %v1382
        %v1450 = vpop.f32.mrf.mxu0
        %v1451 = vadd.f32 %v1386, %v1450
        %1452 = vdwg.mxu0
        %1453 = vmatpush.msra.mxu0 %v497
        %1454 = vmatpush.msra.mxu0 %v495
        %1455 = vmatpush.msra.mxu0 %v492
        %1456 = vmatpush.msra.mxu0 %v490
        %1457 = vmatpush.msra.mxu0 %v487
        %1458 = vmatpush.msra.mxu0 %v485
        %1459 = vmatpush.msra.mxu0 %v482
        %1460 = vmatpush.msra.mxu0 %v480
        %1461 = vmatpush.msra.mxu0 %v477
        %1462 = vmatpush.msra.mxu0 %v475
        %1463 = vmatpush.msra.mxu0 %v472
        %1464 = vmatpush.msra.mxu0 %v470
        %1465 = vmatpush.msra.mxu0 %v467
        %1466 = vmatpush.msra.mxu0 %v465
        %1467 = vmatpush.msra.mxu0 %v462
        %1468 = vmatpush.msra.mxu0 %v460
        %1469 = vmatmul.f32.gmra.mxu0 %v1353
        %v1470 = vpop.f32.mrf.mxu0
        %v1471 = vadd.f32 %v1406, %v1470
        %1472 = vmatmul.f32.gmra.mxu0 %v1355
        %v1473 = vpop.f32.mrf.mxu0
        %v1474 = vadd.f32 %v1409, %v1473
        %1475 = vmatmul.f32.gmra.mxu0 %v1357
        %v1476 = vpop.f32.mrf.mxu0
        %v1477 = vadd.f32 %v1412, %v1476
        %1478 = vmatmul.f32.gmra.mxu0 %v1359
        %v1479 = vpop.f32.mrf.mxu0
        %v1480 = vadd.f32 %v1415, %v1479
        %1481 = vmatmul.f32.gmra.mxu0 %v1361
        %v1482 = vpop.f32.mrf.mxu0
        %v1483 = vadd.f32 %v1418, %v1482
        %1484 = vmatmul.f32.gmra.mxu0 %v1363
        %v1485 = vpop.f32.mrf.mxu0
        %v1486 = vadd.f32 %v1421, %v1485
        %1487 = vmatmul.f32.gmra.mxu0 %v1365
        %v1488 = vpop.f32.mrf.mxu0
        %v1489 = vadd.f32 %v1424, %v1488
        %1490 = vmatmul.f32.gmra.mxu0 %v1367
        %v1491 = vpop.f32.mrf.mxu0
        %v1492 = vadd.f32 %v1427, %v1491
        %1493 = vmatmul.f32.gmra.mxu0 %v1369
        %v1494 = vpop.f32.mrf.mxu0
        %v1495 = vadd.f32 %v1430, %v1494
        %1496 = vmatmul.f32.gmra.mxu0 %v1371
        %v1497 = vpop.f32.mrf.mxu0
        %v1498 = vadd.f32 %v1433, %v1497
        %1499 = vmatmul.f32.gmra.mxu0 %v1373
        %v1500 = vpop.f32.mrf.mxu0
        %v1501 = vadd.f32 %v1436, %v1500
        %1502 = vmatmul.f32.gmra.mxu0 %v1375
        %v1503 = vpop.f32.mrf.mxu0
        %v1504 = vadd.f32 %v1439, %v1503
        %1505 = vmatmul.f32.gmra.mxu0 %v1377
        %v1506 = vpop.f32.mrf.mxu0
        %v1507 = vadd.f32 %v1442, %v1506
        %1508 = vmatmul.f32.gmra.mxu0 %v1379
        %v1509 = vpop.f32.mrf.mxu0
        %v1510 = vadd.f32 %v1445, %v1509
        %1511 = vmatmul.f32.gmra.mxu0 %v1381
        %v1512 = vpop.f32.mrf.mxu0
        %v1513 = vadd.f32 %v1448, %v1512
        %1514 = vmatmul.f32.gmra.mxu0 %v1383
        %v1515 = vpop.f32.mrf.mxu0
        %v1516 = vadd.f32 %v1451, %v1515
        %1517 = vdwg.mxu0
        %v1518 = vtanh.pop %v1471
        %v1519 = vtanh.pop %v1474
        %v1520 = vtanh.pop %v1477
        %v1521 = vtanh.pop %v1480
        %v1522 = vtanh.pop %v1483
        %v1523 = vtanh.pop %v1486
        %v1524 = vtanh.pop %v1489
        %v1525 = vtanh.pop %v1492
        %v1526 = vtanh.pop %v1495
        %v1527 = vtanh.pop %v1498
        %v1528 = vtanh.pop %v1501
        %v1529 = vtanh.pop %v1504
        %v1530 = vtanh.pop %v1507
        %v1531 = vtanh.pop %v1510
        %v1532 = vtanh.pop %v1513
        %v1533 = vtanh.pop %v1516
        %1534 = vst [vmem:[%s290] sm:$0xff] %v1518
        %1535 = vst [vmem:[%s290 + $0x8] sm:$0xff] %v1519
        %1536 = vst [vmem:[%s290 + $0x10] sm:$0xff] %v1520
        %1537 = vst [vmem:[%s290 + $0x18] sm:$0xff] %v1521
        %1538 = vst [vmem:[%s290 + $0x20] sm:$0xff] %v1522
        %1539 = vst [vmem:[%s290 + $0x28] sm:$0xff] %v1523
        %1540 = vst [vmem:[%s290 + $0x30] sm:$0xff] %v1524
        %1541 = vst [vmem:[%s290 + $0x38] sm:$0xff] %v1525
        %1542 = vst [vmem:[%s290 + $0x40] sm:$0xff] %v1526
        %1543 = vst [vmem:[%s290 + $0x48] sm:$0xff] %v1527
        %1544 = vst [vmem:[%s290 + $0x50] sm:$0xff] %v1528
        %1545 = vst [vmem:[%s290 + $0x58] sm:$0xff] %v1529
        %1546 = vst [vmem:[%s290 + $0x60] sm:$0xff] %v1530
        %1547 = vst [vmem:[%s290 + $0x68] sm:$0xff] %v1531
        %1548 = vst [vmem:[%s290 + $0x70] sm:$0xff] %v1532
        %1549 = vst [vmem:[%s290 + $0x78] sm:$0xff] %v1533
        %s1550 = sand.u32 %s186, 1
        %s1551 = scalar_lea.sflag [#allocation3], %s1550
        %s1552 = sand.u32 %s186, 1
        %s1553 = smul.addr %s1552, 128
        %s1554 = scalar_lea.vmem [#allocation2], %s1553
        // Predicated region
        $region49: #{tpu_custom_call.1} parent=47 // pred_check
          %p1555 = pneg %p196
        $region50: #{tpu_custom_call.1} parent=47 // pred_check_branch
          %1557 = sbr.rel (%p1555) target = $region52
        $region51: #{tpu_custom_call.1} parent=47 // pred_region
          %s1558 = smul.u32 16, %s21
          %1560 = vsyncadd %s1551, 0
          %s1561 = smul.addr %s1558, 8
          %s1562 = scalar_lea.hbm %s7, %s1561
          %s1563 = sshll.u32 %s1554, 4
          %s1564 = int_to_ptr.vmem [resolvable:$true] %s1563
          %s1565 = sshll.u32 %s1562, 4
          %s1566 = int_to_ptr.hbm [resolvable:$true] %s1565
          %1571 = dma.vmem_to_hbm [thread:$0]  %s1564, 2048, %s1566, %s1551, 128, 128, 8
        $region52: #{tpu_custom_call.1} parent=47 // pred_fallthru
          _
      $region48: #{tpu_custom_call.1} parent=5 // pred_fallthru
        _
      %p1572 = scmp.le.s32.totalorder 2, %s16
      // Predicated region
      $region53: #{tpu_custom_call.1} parent=5 // pred_check
        %p1573 = pneg %p1572
      $region54: #{tpu_custom_call.1} parent=5 // pred_check_branch
        %1575 = sbr.rel (%p1573) target = $region56
      $region55: #{tpu_custom_call.1} parent=5 // pred_region
        %s1576 = ssub.s32 %s16, 2
        // Predicated region
        $region57: #{tpu_custom_call.1} parent=55 // pred_check
          %p1577 = pneg %p202
        $region58: #{tpu_custom_call.1} parent=55 // pred_check_branch
          %1579 = sbr.rel (%p1577) target = $region60
        $region59: #{tpu_custom_call.1} parent=55 // pred_region
          %s1580 = sand.u32 %s187, 1
          %s1581 = scalar_lea.sflag [#allocation3], %s1580
          %s1582 = sand.u32 %s187, 1
          %s1583 = smul.addr %s1582, 128
          %s1584 = scalar_lea.vmem [#allocation2], %s1583
          %1586 = dma.done %s1581, 2048
        $region60: #{tpu_custom_call.1} parent=55 // pred_fallthru
          _
      $region56: #{tpu_custom_call.1} parent=5 // pred_fallthru
        _
    $region6: #{tpu_custom_call.1} parent=1 // loop_footer
      %s20 = sadd.s32 1, %s16
    $region7: #{tpu_custom_call.1} parent=1 // loop_footer_branch
      %15 = sbr.rel target = $region3
    $region8: #{tpu_custom_call.1} parent=1 // loop_exit
      _
    %1587 = vsyncpa [#allocation3], 1
    %s1588 = scalar_lea.sflag [#allocation3], 1
    %1589 = vsyncpa %s1588, 1

</llo_original>
